<compile_context>
chip_gen: v6e
topology: v6e:2x2x1
jax: 0.10.0
libtpu: 0.0.40
codegen_flags: <defaults>
</compile_context>

<pallas_src>
import functools
import math

import numpy as np

import jax
import jax.numpy as jnp
from jax.experimental import pallas as pl
from jax.experimental.pallas import tpu as pltpu


# -----------------------------------------------------------------------------
# Kernel body: matmul -> scale/shift+ReLU -> matmul -> scale/shift+ReLU -> store
# -----------------------------------------------------------------------------
def tpro_kernel(x_ref, w1_ref, s1_ref, b1_ref, w2_ref, s2_ref, b2_ref, o_ref):
    # Stage 1: per-head Linear (block-diagonal weight, 1/sqrt(slen) + Linear
    # bias pre-folded) followed by fused BN1 + ReLU. MXU operands in the
    # weight dtype (bf16 by default), f32 accumulation, f32 VPU epilogue
    # (v5e has no bf16 VPU/EUP datapath).
    x = x_ref[...].astype(w1_ref.dtype)
    a = jnp.dot(x, w1_ref[...], preferred_element_type=jnp.float32)
    y = jnp.maximum(a * s1_ref[...] + b1_ref[...], 0.0)

    # Stage 2: permute + 1x1x1 Conv3d folded into a block-structured weight;
    # the result lands directly in flat lane-dense (tile_p, out_len*d) layout.
    z = jnp.dot(y.astype(w2_ref.dtype), w2_ref[...],
                preferred_element_type=jnp.float32)
    o_ref[...] = jnp.maximum(z * s2_ref[...] + b2_ref[...], 0.0).astype(o_ref.dtype)


# -----------------------------------------------------------------------------
# Host-side helpers (all trace-time / Python-int work)
# -----------------------------------------------------------------------------
def _round_up(a, b):
    return ((a + b - 1) // b) * b


_VMEM_BUDGET = 48 << 20  # stay well under v7x's 64 MiB physical VMEM


def _vmem_bytes(tp, n_in, n_mid, n_out, in_b, w_b, out_b):
    """Rough per-kernel VMEM footprint for a given row-tile size."""
    return (2 * tp * n_in * in_b                        # x tile, double-buffered
            + 2 * tp * n_out * out_b                    # out tile, double-buffered
            + (n_in * n_mid + n_mid * n_out) * w_b      # W1/W2 (single-buffered)
            + 4 * 2 * (n_mid + n_out)                   # BN scale/shift vectors
            + 3 * tp * n_mid * 4)                       # a / y / z f32 temporaries


def _choose_tile_p(p_total, requested, n_in, n_mid, n_out, in_b, w_b, out_b):
    """Pick (tile_p, padded_rows): multiple of 8, fits the VMEM budget,
    guarantees >= 2 grid steps (v7x megacore) when possible, and preferably
    divides the 8-aligned row count so no extra padding pass is needed."""
    p8 = _round_up(p_total, 8)
    n = p8 // 8
    cap = _round_up(max(8, requested), 8)
    # Re-derive against the 64 MiB-class VMEM budget (not 128 MiB).
    while cap > 8 and _vmem_bytes(cap, n_in, n_mid, n_out, in_b, w_b, out_b) > _VMEM_BUDGET:
        cap = max(8, (cap // 2) // 8 * 8)
    # Guarantee >= 2 grid steps so dimension_semantics=("parallel",) can shard
    # the row grid across v7x's two TensorCores.
    if n >= 2:
        cap = min(cap, 8 * ((n + 1) // 2))
    else:
        cap = 8
    # Largest multiple of 8 that divides p8 and is <= cap  ->  zero extra pad.
    best = 8
    k = 1
    while 8 * k <= cap:
        if n % k == 0:
            best = 8 * k
        k += 1
    if best * 2 >= cap:
        return best, p8
    # Fallback for awkward factorizations: accept a small pad to keep big tiles.
    # TODO(synk): handle the ragged tail with masked rows instead of padding.
    return cap, _round_up(p8, cap)


def fold_tpro_params(params, *, num_head, d_model, seqlen, matmul_dtype):
    """Fold head-Linears / BN1 / Conv3d / BN2 / all biases into two lane-dense
    matmul operands plus fused per-column scale/shift vectors."""
    wq, bq, s1, t1, wc, bc, s2, t2 = params
    nh, out_len, slen = wq.shape
    assert nh == num_head and slen == seqlen
    d = d_model
    assert d % num_head == 0, "d_model must be divisible by num_head"
    hid = d // num_head

    # W1[c*slen + s, k*out_len + o] = wq[c//hid, o, s]/sqrt(slen) if c == k
    blocks = jnp.transpose(jnp.repeat(wq, hid, axis=0), (0, 2, 1)) * (1.0 / math.sqrt(slen))
    W1 = jnp.einsum('cso,ck->csko', blocks, jnp.eye(d, dtype=blocks.dtype))
    W1 = W1.reshape(d * slen, d * out_len).astype(matmul_dtype)
    # W2[c*out_len + o', o*d + k] = wc[k, c] if o' == o
    W2 = jnp.einsum('kc,pq->cpqk', wc, jnp.eye(out_len, dtype=wc.dtype))
    W2 = W2.reshape(d * out_len, out_len * d).astype(matmul_dtype)

    # Fused per-element scale/shift (Linear/Conv biases folded into BN shifts).
    f32 = jnp.float32
    bq_big = jnp.repeat(bq, hid, axis=0).reshape(d * out_len)        # [c*out_len+o]
    s1_big = jnp.repeat(s1, out_len)                                 # -> s1[c]
    sh1_big = bq_big * s1_big + jnp.repeat(t1, out_len)
    s2_big = jnp.tile(s2, out_len)                                   # [o*d+k] -> s2[k]
    sh2_big = jnp.tile(bc * s2 + t2, out_len)
    return (W1,
            s1_big.reshape(1, -1).astype(f32), sh1_big.reshape(1, -1).astype(f32),
            W2,
            s2_big.reshape(1, -1).astype(f32), sh2_big.reshape(1, -1).astype(f32))


# -----------------------------------------------------------------------------
# Jitted forward
# -----------------------------------------------------------------------------
@functools.partial(
    jax.jit,
    static_argnames=("num_head", "tile_p", "matmul_dtype", "out_dtype",
                     "transpose_output", "buffer_invariants"))
def tpro_forward(x, params, *, num_head, tile_p=2048,
                 matmul_dtype=jnp.bfloat16, out_dtype=jnp.float32,
                 transpose_output=True, buffer_invariants=True):
    bs, h, w, d, slen = x.shape
    nh, out_len, _ = params[0].shape
    assert nh == num_head

    W1, s1b, sh1b, W2, s2b, sh2b = fold_tpro_params(
        params, num_head=num_head, d_model=d, seqlen=slen, matmul_dtype=matmul_dtype)

    n_in, n_mid, n_out = d * slen, d * out_len, out_len * d
    in_b = x.dtype.itemsize
    w_b = np.dtype(matmul_dtype).itemsize
    out_b = np.dtype(out_dtype).itemsize

    p_total = bs * h * w
    tp, p_pad = _choose_tile_p(p_total, tile_p, n_in, n_mid, n_out, in_b, w_b, out_b)

    xf = x.reshape(p_total, n_in)
    if p_pad != p_total:
        xf = jnp.pad(xf, ((0, p_pad - p_total), (0, 0)))

    cost = pl.CostEstimate(
        flops=2 * p_pad * (n_in * n_mid + n_mid * n_out),
        transcendentals=0,
        bytes_accessed=(p_pad * n_in * in_b + p_pad * n_out * out_b
                        + (n_in * n_mid + n_mid * n_out) * w_b
                        + 4 * 2 * (n_mid + n_out)),
    )

    # Grid-invariant operands: single-buffer (double-buffering them only burns
    # VMEM since their index_map is constant).
    invariant = {"pipeline_mode": pl.Buffered(1)} if buffer_invariants else {}

    vmem_limit = int(min(
        max(_vmem_bytes(tp, n_in, n_mid, n_out, in_b, w_b, out_b) + (4 << 20), 32 << 20),
        64 << 20))

    out = pl.pallas_call(
        tpro_kernel,
        out_shape=jax.ShapeDtypeStruct((p_pad, n_out), out_dtype),
        grid_spec=pltpu.PrefetchScalarGridSpec(
            num_scalar_prefetch=0,
            grid=(p_pad // tp,),
            in_specs=[
                pl.BlockSpec((tp, n_in), lambda p: (p, 0)),                   # x rows
                pl.BlockSpec((n_in, n_mid), lambda p: (0, 0), **invariant),   # W1
                pl.BlockSpec((1, n_mid), lambda p: (0, 0), **invariant),      # BN1 scale
                pl.BlockSpec((1, n_mid), lambda p: (0, 0), **invariant),      # BN1 shift (+Linear bias)
                pl.BlockSpec((n_mid, n_out), lambda p: (0, 0), **invariant),  # W2
                pl.BlockSpec((1, n_out), lambda p: (0, 0), **invariant),      # BN2 scale
                pl.BlockSpec((1, n_out), lambda p: (0, 0), **invariant),      # BN2 shift (+Conv bias)
            ],
            out_specs=pl.BlockSpec((tp, n_out), lambda p: (p, 0)),
        ),
        compiler_params=pltpu.CompilerParams(
            dimension_semantics=("parallel",),
            vmem_limit_bytes=vmem_limit),
        cost_estimate=cost,
    )(xf, W1, s1b, sh1b, W2, s2b, sh2b)

    # (P, out_len*d) -> (bs, h, w, out_len, d)
    out = out[:p_total].reshape(bs, h, w, out_len, d)
    if transpose_output:
        # Match the PyTorch module's (bs, d_model, out_len, h, w) layout.
        # (Consumers that accept (bs, h, w, out_len, d) can skip this HBM pass.)
        out = out.transpose(0, 4, 3, 1, 2)
    return out


_BUFFER_INVARIANTS = True


def tpro_apply(x, params, **kwargs):
    """Entry point: tries single-buffered invariant operands first and falls
    back to default double-buffering if this JAX build rejects
    pipeline_mode=pl.Buffered(1) (costs only a little extra VMEM)."""
    global _BUFFER_INVARIANTS
    if _BUFFER_INVARIANTS:
        try:
            return tpro_forward(x, params, buffer_invariants=True, **kwargs)
        except Exception:  # feature-detect fallback only
            _BUFFER_INVARIANTS = False
    return tpro_forward(x, params, buffer_invariants=False, **kwargs)


# -----------------------------------------------------------------------------
# Deterministic example params + pure-JAX reference
# -----------------------------------------------------------------------------
def make_params(key, d_model, num_head, seqlen, out_len):
    eps = 1e-5
    ks = jax.random.split(key, 12)
    # Per-head Linear(seqlen, out_len): weight (out_len, seqlen), bias (out_len)
    wq = jax.random.normal(ks[0], (num_head, out_len, seqlen), jnp.float32) / math.sqrt(seqlen)
    bq = 0.1 * jax.random.normal(ks[1], (num_head, out_len), jnp.float32)

    def bn_params(kg, kb, km, kv):
        g = 1.0 + 0.1 * jax.random.normal(kg, (d_model,), jnp.float32)
        b = 0.1 * jax.random.normal(kb, (d_model,), jnp.float32)
        m = 0.1 * jax.random.normal(km, (d_model,), jnp.float32)
        v = 1.0 + 0.1 * jnp.abs(jax.random.normal(kv, (d_model,), jnp.float32))
        scale = g / jnp.sqrt(v + eps)
        shift = b - m * scale
        return scale, shift

    s1, t1 = bn_params(ks[2], ks[3], ks[4], ks[5])
    # Conv3d(d_model, d_model, kernel 1x1x1): weight (C_out, C_in), bias (C_out)
    wc = jax.random.normal(ks[6], (d_model, d_model), jnp.float32) / math.sqrt(d_model)
    bc = 0.1 * jax.random.normal(ks[7], (d_model,), jnp.float32)
    s2, t2 = bn_params(ks[8], ks[9], ks[10], ks[11])
    return (wq, bq, s1, t1, wc, bc, s2, t2)


def tpro_ref(x, params, *, num_head):
    """Pure-JAX reference mirroring the PyTorch forward (inference-mode BN)."""
    wq, bq, s1, t1, wc, bc, s2, t2 = params
    bs, h, w, d, slen = x.shape
    _, out_len, _ = wq.shape
    hid = d // num_head
    val = (x / math.sqrt(slen)).reshape(bs, h, w, num_head, hid, slen)
    qkv = jnp.einsum('bxyics,ios->bxyico', val, wq) + bq[None, None, None, :, None, :]
    qkv = qkv.reshape(bs, h, w, d, out_len).transpose(0, 3, 4, 1, 2)  # (bs, C, O, h, w)

    def bn(v, sc, sh):
        return v * sc[None, :, None, None, None] + sh[None, :, None, None, None]

    y = jnp.maximum(bn(qkv, s1, t1), 0.0)
    z = jnp.einsum('bcohw,kc->bkohw', y, wc) + bc[None, :, None, None, None]
    return jnp.maximum(bn(z, s2, t2), 0.0)


if __name__ == "__main__":
    D_MODEL, NUM_HEAD, SEQLEN, OUT_LEN = 32, 8, 8, 8
    BS, H, W = 2, 4, 4

    key = jax.random.PRNGKey(0)
    kx, kp = jax.random.split(key)
    x = jax.random.normal(kx, (BS, H, W, D_MODEL, SEQLEN), jnp.float32)
    params = make_params(kp, D_MODEL, NUM_HEAD, SEQLEN, OUT_LEN)

    ref = tpro_ref(x, params, num_head=NUM_HEAD)

    # Default fast path: bf16 MXU operands, f32 accumulation + f32 epilogue.
    out = jax.block_until_ready(tpro_apply(x, params, num_head=NUM_HEAD))
    assert out.shape == (BS, D_MODEL, OUT_LEN, H, W), out.shape
    err_bf16 = float(jnp.max(jnp.abs(out - ref)))
    if err_bf16 > 1e-1:
        raise AssertionError(f"bf16 path mismatch vs reference, max abs err = {err_bf16}")

    # Exact path: f32 MXU operands must hit the tight tolerance.
    out_f32 = jax.block_until_ready(
        tpro_apply(x, params, num_head=NUM_HEAD, matmul_dtype=jnp.float32))
    err_f32 = float(jnp.max(jnp.abs(out_f32 - ref)))
    if err_f32 > 1e-3:
        raise AssertionError(f"f32 path mismatch vs reference, max abs err = {err_f32}")

    print("KERNEL_OK")
</pallas_src>

<mosaic_0001>
module attributes {stable_mosaic.version = 11 : i64} {
  func.func @tpro_kernel(%arg0: i32, %arg1: memref<16x256xf32, #tpu.memory_space<vmem>>, %arg2: memref<256x256xbf16, #tpu.memory_space<vmem>>, %arg3: memref<1x256xf32, #tpu.memory_space<vmem>>, %arg4: memref<1x256xf32, #tpu.memory_space<vmem>>, %arg5: memref<256x256xbf16, #tpu.memory_space<vmem>>, %arg6: memref<1x256xf32, #tpu.memory_space<vmem>>, %arg7: memref<1x256xf32, #tpu.memory_space<vmem>>, %arg8: memref<16x256xf32, #tpu.memory_space<vmem>>) attributes {dimension_semantics = [#tpu.dimension_semantics<parallel>], iteration_bounds = array<i64: 2>, scalar_prefetch = 0 : i64, scratch_operands = 0 : i64, tpu.core_type = #tpu.core_type<tc>, window_params = [{transform_indices = @transform_0, window_bounds = array<i64: 16, 256>}, {pipeline_mode = #tpu.pipeline_mode<synchronous>, transform_indices = @transform_1, window_bounds = array<i64: 256, 256>}, {pipeline_mode = #tpu.pipeline_mode<synchronous>, transform_indices = @transform_2, window_bounds = array<i64: 1, 256>}, {pipeline_mode = #tpu.pipeline_mode<synchronous>, transform_indices = @transform_3, window_bounds = array<i64: 1, 256>}, {pipeline_mode = #tpu.pipeline_mode<synchronous>, transform_indices = @transform_4, window_bounds = array<i64: 256, 256>}, {pipeline_mode = #tpu.pipeline_mode<synchronous>, transform_indices = @transform_5, window_bounds = array<i64: 1, 256>}, {pipeline_mode = #tpu.pipeline_mode<synchronous>, transform_indices = @transform_6, window_bounds = array<i64: 1, 256>}, {transform_indices = @transform_7, window_bounds = array<i64: 16, 256>}]} {
    %c0 = arith.constant 0 : index
    %c0_0 = arith.constant 0 : index
    %0 = vector.load %arg1[%c0, %c0_0] : memref<16x256xf32, #tpu.memory_space<vmem>>, vector<16x256xf32>
    %1 = arith.truncf %0 : vector<16x256xf32> to vector<16x256xbf16>
    %c0_1 = arith.constant 0 : index
    %c0_2 = arith.constant 0 : index
    %2 = vector.load %arg2[%c0_1, %c0_2] : memref<256x256xbf16, #tpu.memory_space<vmem>>, vector<256x256xbf16>
    %cst = arith.constant dense<0.000000e+00> : vector<16x256xf32>
    %3 = tpu.matmul %1, %2, %cst {dimension_numbers = #tpu.dot_dimension_numbers<[1], [0], [0], [1], [0, 0, 1, 1], [], []>} : vector<16x256xbf16>, vector<256x256xbf16>, vector<16x256xf32> -> vector<16x256xf32>
    %c0_3 = arith.constant 0 : index
    %c0_4 = arith.constant 0 : index
    %4 = vector.load %arg3[%c0_3, %c0_4] : memref<1x256xf32, #tpu.memory_space<vmem>>, vector<1x256xf32>
    %5 = vector.broadcast %4 : vector<1x256xf32> to vector<16x256xf32>
    %6 = arith.mulf %3, %5 : vector<16x256xf32>
    %c0_5 = arith.constant 0 : index
    %c0_6 = arith.constant 0 : index
    %7 = vector.load %arg4[%c0_5, %c0_6] : memref<1x256xf32, #tpu.memory_space<vmem>>, vector<1x256xf32>
    %8 = vector.broadcast %7 : vector<1x256xf32> to vector<16x256xf32>
    %9 = arith.addf %6, %8 : vector<16x256xf32>
    %cst_7 = arith.constant 0.000000e+00 : f32
    %10 = vector.broadcast %cst_7 : f32 to vector<16x256xf32>
    %11 = arith.maximumf %9, %10 : vector<16x256xf32>
    %12 = arith.truncf %11 : vector<16x256xf32> to vector<16x256xbf16>
    %c0_8 = arith.constant 0 : index
    %c0_9 = arith.constant 0 : index
    %13 = vector.load %arg5[%c0_8, %c0_9] : memref<256x256xbf16, #tpu.memory_space<vmem>>, vector<256x256xbf16>
    %cst_10 = arith.constant dense<0.000000e+00> : vector<16x256xf32>
    %14 = tpu.matmul %12, %13, %cst_10 {dimension_numbers = #tpu.dot_dimension_numbers<[1], [0], [0], [1], [0, 0, 1, 1], [], []>} : vector<16x256xbf16>, vector<256x256xbf16>, vector<16x256xf32> -> vector<16x256xf32>
    %c0_11 = arith.constant 0 : index
    %c0_12 = arith.constant 0 : index
    %15 = vector.load %arg6[%c0_11, %c0_12] : memref<1x256xf32, #tpu.memory_space<vmem>>, vector<1x256xf32>
    %16 = vector.broadcast %15 : vector<1x256xf32> to vector<16x256xf32>
    %17 = arith.mulf %14, %16 : vector<16x256xf32>
    %c0_13 = arith.constant 0 : index
    %c0_14 = arith.constant 0 : index
    %18 = vector.load %arg7[%c0_13, %c0_14] : memref<1x256xf32, #tpu.memory_space<vmem>>, vector<1x256xf32>
    %19 = vector.broadcast %18 : vector<1x256xf32> to vector<16x256xf32>
    %20 = arith.addf %17, %19 : vector<16x256xf32>
    %cst_15 = arith.constant 0.000000e+00 : f32
    %21 = vector.broadcast %cst_15 : f32 to vector<16x256xf32>
    %22 = arith.maximumf %20, %21 : vector<16x256xf32>
    %c0_16 = arith.constant 0 : index
    %c0_17 = arith.constant 0 : index
    %23 = vector.load %arg8[%c0_16, %c0_17] : memref<16x256xf32, #tpu.memory_space<vmem>>, vector<16x256xf32>
    tpu.vector_store %arg8[%c0_16, %c0_17], %22 {strides = array<i32>} : memref<16x256xf32, #tpu.memory_space<vmem>>, vector<16x256xf32>,
    return
  }
  func.func @transform_0(%arg0: i32) -> (i32, i32) {
    %c0_i32 = arith.constant 0 : i32
    %c0_i32_0 = arith.constant 0 : i32
    return %arg0, %c0_i32 : i32, i32
  }
  func.func @transform_1(%arg0: i32) -> (i32, i32) {
    %c0_i32 = arith.constant 0 : i32
    %c0_i32_0 = arith.constant 0 : i32
    %c0_i32_1 = arith.constant 0 : i32
    return %c0_i32, %c0_i32_0 : i32, i32
  }
  func.func @transform_2(%arg0: i32) -> (i32, i32) {
    %c0_i32 = arith.constant 0 : i32
    %c0_i32_0 = arith.constant 0 : i32
    %c0_i32_1 = arith.constant 0 : i32
    return %c0_i32, %c0_i32_0 : i32, i32
  }
  func.func @transform_3(%arg0: i32) -> (i32, i32) {
    %c0_i32 = arith.constant 0 : i32
    %c0_i32_0 = arith.constant 0 : i32
    %c0_i32_1 = arith.constant 0 : i32
    return %c0_i32, %c0_i32_0 : i32, i32
  }
  func.func @transform_4(%arg0: i32) -> (i32, i32) {
    %c0_i32 = arith.constant 0 : i32
    %c0_i32_0 = arith.constant 0 : i32
    %c0_i32_1 = arith.constant 0 : i32
    return %c0_i32, %c0_i32_0 : i32, i32
  }
  func.func @transform_5(%arg0: i32) -> (i32, i32) {
    %c0_i32 = arith.constant 0 : i32
    %c0_i32_0 = arith.constant 0 : i32
    %c0_i32_1 = arith.constant 0 : i32
    return %c0_i32, %c0_i32_0 : i32, i32
  }
  func.func @transform_6(%arg0: i32) -> (i32, i32) {
    %c0_i32 = arith.constant 0 : i32
    %c0_i32_0 = arith.constant 0 : i32
    %c0_i32_1 = arith.constant 0 : i32
    return %c0_i32, %c0_i32_0 : i32, i32
  }
  func.func @transform_7(%arg0: i32) -> (i32, i32) {
    %c0_i32 = arith.constant 0 : i32
    %c0_i32_0 = arith.constant 0 : i32
    return %arg0, %c0_i32 : i32, i32
  }
}

module attributes {stable_mosaic.version = 11 : i64} {
  func.func @tpro_kernel(%arg0: i32, %arg1: memref<16x256xf32, #tpu.memory_space<vmem>>, %arg2: memref<256x256xbf16, #tpu.memory_space<vmem>>, %arg3: memref<1x256xf32, #tpu.memory_space<vmem>>, %arg4: memref<1x256xf32, #tpu.memory_space<vmem>>, %arg5: memref<256x256xbf16, #tpu.memory_space<vmem>>, %arg6: memref<1x256xf32, #tpu.memory_space<vmem>>, %arg7: memref<1x256xf32, #tpu.memory_space<vmem>>, %arg8: memref<16x256xf32, #tpu.memory_space<vmem>>) attributes {dimension_semantics = [#tpu.dimension_semantics<parallel>], iteration_bounds = array<i64: 2>, scalar_prefetch = 0 : i64, scratch_operands = 0 : i64, tpu.core_type = #tpu.core_type<tc>, window_params = [{transform_indices = @transform_0, window_bounds = array<i64: 16, 256>}, {pipeline_mode = #tpu.pipeline_mode<synchronous>, transform_indices = @transform_1, window_bounds = array<i64: 256, 256>}, {pipeline_mode = #tpu.pipeline_mode<synchronous>, transform_indices = @transform_2, window_bounds = array<i64: 1, 256>}, {pipeline_mode = #tpu.pipeline_mode<synchronous>, transform_indices = @transform_3, window_bounds = array<i64: 1, 256>}, {pipeline_mode = #tpu.pipeline_mode<synchronous>, transform_indices = @transform_4, window_bounds = array<i64: 256, 256>}, {pipeline_mode = #tpu.pipeline_mode<synchronous>, transform_indices = @transform_5, window_bounds = array<i64: 1, 256>}, {pipeline_mode = #tpu.pipeline_mode<synchronous>, transform_indices = @transform_6, window_bounds = array<i64: 1, 256>}, {transform_indices = @transform_7, window_bounds = array<i64: 16, 256>}]} {
    %c0 = arith.constant 0 : index
    %c0_0 = arith.constant 0 : index
    %0 = vector.load %arg1[%c0, %c0_0] : memref<16x256xf32, #tpu.memory_space<vmem>>, vector<16x256xf32>
    %1 = arith.truncf %0 : vector<16x256xf32> to vector<16x256xbf16>
    %c0_1 = arith.constant 0 : index
    %c0_2 = arith.constant 0 : index
    %2 = vector.load %arg2[%c0_1, %c0_2] : memref<256x256xbf16, #tpu.memory_space<vmem>>, vector<256x256xbf16>
    %cst = arith.constant dense<0.000000e+00> : vector<16x256xf32>
    %3 = tpu.matmul %1, %2, %cst {dimension_numbers = #tpu.dot_dimension_numbers<[1], [0], [0], [1], [0, 0, 1, 1], [], []>} : vector<16x256xbf16>, vector<256x256xbf16>, vector<16x256xf32> -> vector<16x256xf32>
    %c0_3 = arith.constant 0 : index
    %c0_4 = arith.constant 0 : index
    %4 = vector.load %arg3[%c0_3, %c0_4] : memref<1x256xf32, #tpu.memory_space<vmem>>, vector<1x256xf32>
    %5 = vector.broadcast %4 : vector<1x256xf32> to vector<16x256xf32>
    %6 = arith.mulf %3, %5 : vector<16x256xf32>
    %c0_5 = arith.constant 0 : index
    %c0_6 = arith.constant 0 : index
    %7 = vector.load %arg4[%c0_5, %c0_6] : memref<1x256xf32, #tpu.memory_space<vmem>>, vector<1x256xf32>
    %8 = vector.broadcast %7 : vector<1x256xf32> to vector<16x256xf32>
    %9 = arith.addf %6, %8 : vector<16x256xf32>
    %cst_7 = arith.constant 0.000000e+00 : f32
    %10 = vector.broadcast %cst_7 : f32 to vector<16x256xf32>
    %11 = arith.maximumf %9, %10 : vector<16x256xf32>
    %12 = arith.truncf %11 : vector<16x256xf32> to vector<16x256xbf16>
    %c0_8 = arith.constant 0 : index
    %c0_9 = arith.constant 0 : index
    %13 = vector.load %arg5[%c0_8, %c0_9] : memref<256x256xbf16, #tpu.memory_space<vmem>>, vector<256x256xbf16>
    %cst_10 = arith.constant dense<0.000000e+00> : vector<16x256xf32>
    %14 = tpu.matmul %12, %13, %cst_10 {dimension_numbers = #tpu.dot_dimension_numbers<[1], [0], [0], [1], [0, 0, 1, 1], [], []>} : vector<16x256xbf16>, vector<256x256xbf16>, vector<16x256xf32> -> vector<16x256xf32>
    %c0_11 = arith.constant 0 : index
    %c0_12 = arith.constant 0 : index
    %15 = vector.load %arg6[%c0_11, %c0_12] : memref<1x256xf32, #tpu.memory_space<vmem>>, vector<1x256xf32>
    %16 = vector.broadcast %15 : vector<1x256xf32> to vector<16x256xf32>
    %17 = arith.mulf %14, %16 : vector<16x256xf32>
    %c0_13 = arith.constant 0 : index
    %c0_14 = arith.constant 0 : index
    %18 = vector.load %arg7[%c0_13, %c0_14] : memref<1x256xf32, #tpu.memory_space<vmem>>, vector<1x256xf32>
    %19 = vector.broadcast %18 : vector<1x256xf32> to vector<16x256xf32>
    %20 = arith.addf %17, %19 : vector<16x256xf32>
    %cst_15 = arith.constant 0.000000e+00 : f32
    %21 = vector.broadcast %cst_15 : f32 to vector<16x256xf32>
    %22 = arith.maximumf %20, %21 : vector<16x256xf32>
    %c0_16 = arith.constant 0 : index
    %c0_17 = arith.constant 0 : index
    %23 = vector.load %arg8[%c0_16, %c0_17] : memref<16x256xf32, #tpu.memory_space<vmem>>, vector<16x256xf32>
    tpu.vector_store %arg8[%c0_16, %c0_17], %22 {strides = array<i32>} : memref<16x256xf32, #tpu.memory_space<vmem>>, vector<16x256xf32>,
    return
  }
  func.func @transform_0(%arg0: i32) -> (i32, i32) {
    %c0_i32 = arith.constant 0 : i32
    %c0_i32_0 = arith.constant 0 : i32
    return %arg0, %c0_i32 : i32, i32
  }
  func.func @transform_1(%arg0: i32) -> (i32, i32) {
    %c0_i32 = arith.constant 0 : i32
    %c0_i32_0 = arith.constant 0 : i32
    %c0_i32_1 = arith.constant 0 : i32
    return %c0_i32, %c0_i32_0 : i32, i32
  }
  func.func @transform_2(%arg0: i32) -> (i32, i32) {
    %c0_i32 = arith.constant 0 : i32
    %c0_i32_0 = arith.constant 0 : i32
    %c0_i32_1 = arith.constant 0 : i32
    return %c0_i32, %c0_i32_0 : i32, i32
  }
  func.func @transform_3(%arg0: i32) -> (i32, i32) {
    %c0_i32 = arith.constant 0 : i32
    %c0_i32_0 = arith.constant 0 : i32
    %c0_i32_1 = arith.constant 0 : i32
    return %c0_i32, %c0_i32_0 : i32, i32
  }
  func.func @transform_4(%arg0: i32) -> (i32, i32) {
    %c0_i32 = arith.constant 0 : i32
    %c0_i32_0 = arith.constant 0 : i32
    %c0_i32_1 = arith.constant 0 : i32
    return %c0_i32, %c0_i32_0 : i32, i32
  }
  func.func @transform_5(%arg0: i32) -> (i32, i32) {
    %c0_i32 = arith.constant 0 : i32
    %c0_i32_0 = arith.constant 0 : i32
    %c0_i32_1 = arith.constant 0 : i32
    return %c0_i32, %c0_i32_0 : i32, i32
  }
  func.func @transform_6(%arg0: i32) -> (i32, i32) {
    %c0_i32 = arith.constant 0 : i32
    %c0_i32_0 = arith.constant 0 : i32
    %c0_i32_1 = arith.constant 0 : i32
    return %c0_i32, %c0_i32_0 : i32, i32
  }
  func.func @transform_7(%arg0: i32) -> (i32, i32) {
    %c0_i32 = arith.constant 0 : i32
    %c0_i32_0 = arith.constant 0 : i32
    return %arg0, %c0_i32 : i32, i32
  }
}

</mosaic_0001>

<llo_original>
// kernel: tile.17
$region0: #{tile.17}
  #allocation0 [shape = 's32[1]{0}', space=sflag, size = 0x4, scoped, tag = 'scoped memory for tile.17']
  %s0 = inlined_call_operand.vmem [shape: f32[32], index: 0, kind: input, shape index: {}]
  %s1 = inlined_call_operand.vmem [shape: f32[8,32], index: 1, kind: output, shape index: {}]
  // Predicated region
  $region2: #{tile.17} parent=0 // pred_check
    _
  $region3: #{tile.17} parent=0 // pred_check_branch
    %3 = sbr.rel (0) target = $region5
  $region4: #{tile.17} parent=0 // pred_region
    _
  $region5: #{tile.17} parent=0 // pred_fallthru
    _
  %v4 = vld [vmem:[%s0] ss:$0 sm:$0xff]
  %5 = vst [vmem:[%s1] sm:$0xff] %v4

// kernel: tile.19
$region0: #{tile.19}
  %s0 = inlined_call_operand.vmem [shape: f32[8,32], index: 0, kind: input, shape index: {}]
  %s1 = inlined_call_operand.vmem [shape: f32[1,256], index: 1, kind: output, shape index: {}]
  $region1: #{tile.19} parent=0
    #allocation0 [shape = 'u8[8192]{0}', space=vmem, size = 0x2000, scoped, tag = 'scoped mem for output reshape']
    %s2 = smov 3
    %v3 = vld [vmem:[%s0] ss:$4 sm:%s2]
    %vm4 = vcmask 261120
    %5 = vst.msk [vmem:[#allocation0] ss:$8 sm:$0x3] %vm4, %v3
    %s6 = scalar_lea.vmem %s0, 3
    %s7 = smov 3
    %v8 = vld [vmem:[%s6] ss:$4 sm:%s7]
    %9 = vrot.lane.b32.xlu0 %v8, 96
    %v10 = vpop.permute.xlu0 %9
    %vm11 = vcmask 1048320
    %12 = vst.msk [vmem:[#allocation0] ss:$8 sm:$0x3] %vm11, %v10
    %s13 = scalar_lea.vmem %s0, 2
    %s14 = smov 3
    %v15 = vld [vmem:[%s13] ss:$4 sm:%s14]
    %16 = vrot.lane.b32.xlu0 %v15, 64
    %v17 = vpop.permute.xlu0 %16
    %vm18 = vcmask 785920
    %19 = vst.msk [vmem:[#allocation0] ss:$8 sm:$0x3] %vm18, %v17
    %s20 = scalar_lea.vmem %s0, 1
    %s21 = smov 3
    %v22 = vld [vmem:[%s20] ss:$4 sm:%s21]
    %23 = vrot.lane.b32.xlu0 %v22, 32
    %v24 = vpop.permute.xlu0 %23
    %vm25 = vcmask 523520
    %26 = vst.msk [vmem:[#allocation0] ss:$8 sm:$0x3] %vm25, %v24
    %s28 = sshll.u32 1, 1
    %s29 = ssub.s32 %s28, 1
    %v31 = vld [vmem:[#allocation0] sm:%s29]
    %s32 = sshll.u32 1, 1
    %s33 = ssub.s32 %s32, 1
    %34 = vst [vmem:[%s1] sm:%s33] %v31
    %s35 = scalar_lea.vmem [#allocation0], 8
    %v36 = vld [vmem:[%s35] sm:%s29]
    %s37 = sshll.u32 1, 1
    %s38 = ssub.s32 %s37, 1
    %s39 = scalar_lea.vmem %s1, 1
    %40 = vst [vmem:[%s39] sm:%s38] %v36

// kernel: tpro_forward.1
$region0: #{tpro_forward.1}
  #allocation0 [shape = 'u32[]', space=smem, size = 0x4, offset = 0x4, fixed_abs, tag = 'smem constant byte address 0x4 - core index']
  #allocation1 [shape = 'u32[144,128]{1,0:T(1,128)}', space=vmem, size = 0x12000, scoped, tag = 'internal scratch']
  %s0 = inlined_call_operand.vmem [shape: f32[32,256], index: 0, kind: input, shape index: {}]
  %s1 = inlined_call_operand.vmem [shape: bf16[256,256], index: 1, kind: input, shape index: {}]
  %s2 = inlined_call_operand.vmem [shape: f32[1,256], index: 2, kind: input, shape index: {}]
  %s3 = inlined_call_operand.vmem [shape: f32[1,256], index: 3, kind: input, shape index: {}]
  %s4 = inlined_call_operand.vmem [shape: bf16[256,256], index: 4, kind: input, shape index: {}]
  %s5 = inlined_call_operand.vmem [shape: f32[1,256], index: 5, kind: input, shape index: {}]
  %s6 = inlined_call_operand.vmem [shape: f32[1,256], index: 6, kind: input, shape index: {}]
  %s7 = inlined_call_operand.vmem [shape: f32[32,256], index: 7, kind: output, shape index: {}]
  %s8 = sld [smem:[#allocation0]]
  $region61: #{tpro_forward.1} parent=0
    _
  %s10 = ssub.s32 1, %s8
  %s11 = scalar_select 0, %s10, %s8
  loop: start=0, step=1, limit=4
  $region2: #{tpro_forward.1} parent=0 // loop_pre_header
    _
  $region3: #{tpro_forward.1} parent=0 // loop_header
    %s13 = sphi 0, %s17
    %p14 = scmp.ge.s32.totalorder %s13, 4
    %s23 = sphi 0, %s25
    %s26 = sphi 0, %s23
    %s27 = sphi 0, %s26
    %s43 = sphi 0, %s27
    %s47 = sphi 0, %s47
    %s49 = sphi 0, %s47
    %s50 = sphi 0, %s49
    %s64 = sphi 0, %s50
    %s68 = sphi 0, %s68
    %s70 = sphi 0, %s68
    %s71 = sphi 0, %s70
    %s85 = sphi 0, %s71
    %s89 = sphi 0, %s89
    %s91 = sphi 0, %s89
    %s92 = sphi 0, %s91
    %s106 = sphi 0, %s92
    %s110 = sphi 0, %s110
    %s112 = sphi 0, %s110
    %s113 = sphi 0, %s112
    %s127 = sphi 0, %s113
    %s131 = sphi 0, %s131
    %s133 = sphi 0, %s131
    %s134 = sphi 0, %s133
    %s148 = sphi 0, %s134
    %s152 = sphi 0, %s152
    %s154 = sphi 0, %s152
    %s155 = sphi 0, %s154
    %s169 = sphi 0, %s155
    %s175 = sphi 0, %s177
    %s178 = sphi 0, %s175
    %s179 = sphi 0, %s178
    %s195 = sphi 0, %s179
  $region4: #{tpro_forward.1} parent=0 // loop_header_branch
    %16 = sbr.rel (%p14) target = $region8
  $region5: #{tpro_forward.1} parent=0 // loop_body
    %s18 = ssub.s32 %s13, 1
    %s19 = ssub.s32 %s13, 2
    %s20 = sadd.s32 %s13, 1
    %s21 = ssub.s32 %s13, %s20
    %p22 = scmp.eq.s32.totalorder %s21, 0
    %s24 = sadd.s32 %s23, 1
    %s25 = scalar_select %p22, %s23, %s24
    %p28 = pneg %p22
    %p29 = scmp.eq.s32.totalorder %s13, 1
    %p30 = por %p28, %p29
    %p31 = scmp.ne.s32.totalorder %s23, %s26
    %p32 = scmp.eq.s32.totalorder %s13, 0
    %p33 = por %p31, %p32
    %p34 = scmp.ne.s32.totalorder %s23, %s26
    %p35 = scmp.eq.s32.totalorder %s18, 1
    %p36 = por %p34, %p35
    %p37 = scmp.ne.s32.totalorder %s26, %s27
    %p38 = scmp.eq.s32.totalorder %s18, 0
    %p39 = por %p37, %p38
    %p40 = scmp.ne.s32.totalorder %s26, %s27
    %p41 = scmp.eq.s32.totalorder %s19, 1
    %p42 = por %p40, %p41
    %p44 = scmp.ne.s32.totalorder %s27, %s43
    %p45 = scmp.eq.s32.totalorder %s19, 0
    %p46 = por %p44, %p45
    %s48 = sadd.s32 %s47, 1
    %p51 = scmp.eq.s32.totalorder %s13, 1
    %p52 = scmp.ne.s32.totalorder %s47, %s49
    %p53 = scmp.eq.s32.totalorder %s13, 0
    %p54 = por %p52, %p53
    %p55 = scmp.ne.s32.totalorder %s47, %s49
    %p56 = scmp.eq.s32.totalorder %s18, 1
    %p57 = por %p55, %p56
    %p58 = scmp.ne.s32.totalorder %s49, %s50
    %p59 = scmp.eq.s32.totalorder %s18, 0
    %p60 = por %p58, %p59
    %p61 = scmp.ne.s32.totalorder %s49, %s50
    %p62 = scmp.eq.s32.totalorder %s19, 1
    %p63 = por %p61, %p62
    %p65 = scmp.ne.s32.totalorder %s50, %s64
    %p66 = scmp.eq.s32.totalorder %s19, 0
    %p67 = por %p65, %p66
    %s69 = sadd.s32 %s68, 1
    %p72 = scmp.eq.s32.totalorder %s13, 1
    %p73 = scmp.ne.s32.totalorder %s68, %s70
    %p74 = scmp.eq.s32.totalorder %s13, 0
    %p75 = por %p73, %p74
    %p76 = scmp.ne.s32.totalorder %s68, %s70
    %p77 = scmp.eq.s32.totalorder %s18, 1
    %p78 = por %p76, %p77
    %p79 = scmp.ne.s32.totalorder %s70, %s71
    %p80 = scmp.eq.s32.totalorder %s18, 0
    %p81 = por %p79, %p80
    %p82 = scmp.ne.s32.totalorder %s70, %s71
    %p83 = scmp.eq.s32.totalorder %s19, 1
    %p84 = por %p82, %p83
    %p86 = scmp.ne.s32.totalorder %s71, %s85
    %p87 = scmp.eq.s32.totalorder %s19, 0
    %p88 = por %p86, %p87
    %s90 = sadd.s32 %s89, 1
    %p93 = scmp.eq.s32.totalorder %s13, 1
    %p94 = scmp.ne.s32.totalorder %s89, %s91
    %p95 = scmp.eq.s32.totalorder %s13, 0
    %p96 = por %p94, %p95
    %p97 = scmp.ne.s32.totalorder %s89, %s91
    %p98 = scmp.eq.s32.totalorder %s18, 1
    %p99 = por %p97, %p98
    %p100 = scmp.ne.s32.totalorder %s91, %s92
    %p101 = scmp.eq.s32.totalorder %s18, 0
    %p102 = por %p100, %p101
    %p103 = scmp.ne.s32.totalorder %s91, %s92
    %p104 = scmp.eq.s32.totalorder %s19, 1
    %p105 = por %p103, %p104
    %p107 = scmp.ne.s32.totalorder %s92, %s106
    %p108 = scmp.eq.s32.totalorder %s19, 0
    %p109 = por %p107, %p108
    %s111 = sadd.s32 %s110, 1
    %p114 = scmp.eq.s32.totalorder %s13, 1
    %p115 = scmp.ne.s32.totalorder %s110, %s112
    %p116 = scmp.eq.s32.totalorder %s13, 0
    %p117 = por %p115, %p116
    %p118 = scmp.ne.s32.totalorder %s110, %s112
    %p119 = scmp.eq.s32.totalorder %s18, 1
    %p120 = por %p118, %p119
    %p121 = scmp.ne.s32.totalorder %s112, %s113
    %p122 = scmp.eq.s32.totalorder %s18, 0
    %p123 = por %p121, %p122
    %p124 = scmp.ne.s32.totalorder %s112, %s113
    %p125 = scmp.eq.s32.totalorder %s19, 1
    %p126 = por %p124, %p125
    %p128 = scmp.ne.s32.totalorder %s113, %s127
    %p129 = scmp.eq.s32.totalorder %s19, 0
    %p130 = por %p128, %p129
    %s132 = sadd.s32 %s131, 1
    %p135 = scmp.eq.s32.totalorder %s13, 1
    %p136 = scmp.ne.s32.totalorder %s131, %s133
    %p137 = scmp.eq.s32.totalorder %s13, 0
    %p138 = por %p136, %p137
    %p139 = scmp.ne.s32.totalorder %s131, %s133
    %p140 = scmp.eq.s32.totalorder %s18, 1
    %p141 = por %p139, %p140
    %p142 = scmp.ne.s32.totalorder %s133, %s134
    %p143 = scmp.eq.s32.totalorder %s18, 0
    %p144 = por %p142, %p143
    %p145 = scmp.ne.s32.totalorder %s133, %s134
    %p146 = scmp.eq.s32.totalorder %s19, 1
    %p147 = por %p145, %p146
    %p149 = scmp.ne.s32.totalorder %s134, %s148
    %p150 = scmp.eq.s32.totalorder %s19, 0
    %p151 = por %p149, %p150
    %s153 = sadd.s32 %s152, 1
    %p156 = scmp.eq.s32.totalorder %s13, 1
    %p157 = scmp.ne.s32.totalorder %s152, %s154
    %p158 = scmp.eq.s32.totalorder %s13, 0
    %p159 = por %p157, %p158
    %p160 = scmp.ne.s32.totalorder %s152, %s154
    %p161 = scmp.eq.s32.totalorder %s18, 1
    %p162 = por %p160, %p161
    %p163 = scmp.ne.s32.totalorder %s154, %s155
    %p164 = scmp.eq.s32.totalorder %s18, 0
    %p165 = por %p163, %p164
    %p166 = scmp.ne.s32.totalorder %s154, %s155
    %p167 = scmp.eq.s32.totalorder %s19, 1
    %p168 = por %p166, %p167
    %p170 = scmp.ne.s32.totalorder %s155, %s169
    %p171 = scmp.eq.s32.totalorder %s19, 0
    %p172 = por %p170, %p171
    %s173 = ssub.s32 %s13, %s20
    %p174 = scmp.eq.s32.totalorder %s173, 0
    %s176 = sadd.s32 %s175, 1
    %s177 = scalar_select %p174, %s175, %s176
    %p180 = pneg %p174
    %p181 = scmp.eq.s32.totalorder %s13, 1
    %p182 = por %p180, %p181
    %p183 = scmp.ne.s32.totalorder %s175, %s178
    %p184 = scmp.eq.s32.totalorder %s13, 0
    %p185 = por %p183, %p184
    %p186 = scmp.ne.s32.totalorder %s175, %s178
    %p187 = scmp.eq.s32.totalorder %s18, 1
    %p188 = por %p186, %p187
    %p189 = scmp.ne.s32.totalorder %s178, %s179
    %p190 = scmp.eq.s32.totalorder %s18, 0
    %p191 = por %p189, %p190
    %p192 = scmp.ne.s32.totalorder %s178, %s179
    %p193 = scmp.eq.s32.totalorder %s19, 1
    %p194 = por %p192, %p193
    %p196 = scmp.ne.s32.totalorder %s179, %s195
    %p197 = scmp.eq.s32.totalorder %s19, 0
    %p198 = por %p196, %p197
    %p199 = scmp.le.s32.totalorder 1, %s13
    %p200 = scmp.lt.s32.totalorder %s13, 3
    %p201 = pnand %p199, %p200
    %p202 = pneg %p201
    // Predicated region
    $region9: #{tpro_forward.1} parent=5 // pred_check
      _
    $region10: #{tpro_forward.1} parent=5 // pred_check_branch
      %204 = sbr.rel (%p201) target = $region12
    $region11: #{tpro_forward.1} parent=5 // pred_region
      %s205 = ssub.s32 %s13, 1
      // Predicated region
      $region13: #{tpro_forward.1} parent=11 // pred_check
        %p206 = pneg %p60
      $region14: #{tpro_forward.1} parent=11 // pred_check_branch
        %208 = sbr.rel (%p206) target = $region16
      $region15: #{tpro_forward.1} parent=11 // pred_region
        _
      $region16: #{tpro_forward.1} parent=11 // pred_fallthru
        _
      // Predicated region
      $region17: #{tpro_forward.1} parent=11 // pred_check
        %p209 = pneg %p81
      $region18: #{tpro_forward.1} parent=11 // pred_check_branch
        %211 = sbr.rel (%p209) target = $region20
      $region19: #{tpro_forward.1} parent=11 // pred_region
        _
      $region20: #{tpro_forward.1} parent=11 // pred_fallthru
        _
      // Predicated region
      $region21: #{tpro_forward.1} parent=11 // pred_check
        %p212 = pneg %p102
      $region22: #{tpro_forward.1} parent=11 // pred_check_branch
        %214 = sbr.rel (%p212) target = $region24
      $region23: #{tpro_forward.1} parent=11 // pred_region
        _
      $region24: #{tpro_forward.1} parent=11 // pred_fallthru
        _
      // Predicated region
      $region25: #{tpro_forward.1} parent=11 // pred_check
        %p215 = pneg %p123
      $region26: #{tpro_forward.1} parent=11 // pred_check_branch
        %217 = sbr.rel (%p215) target = $region28
      $region27: #{tpro_forward.1} parent=11 // pred_region
        _
      $region28: #{tpro_forward.1} parent=11 // pred_fallthru
        _
      // Predicated region
      $region29: #{tpro_forward.1} parent=11 // pred_check
        %p218 = pneg %p144
      $region30: #{tpro_forward.1} parent=11 // pred_check_branch
        %220 = sbr.rel (%p218) target = $region32
      $region31: #{tpro_forward.1} parent=11 // pred_region
        _
      $region32: #{tpro_forward.1} parent=11 // pred_fallthru
        _
      // Predicated region
      $region33: #{tpro_forward.1} parent=11 // pred_check
        %p221 = pneg %p165
      $region34: #{tpro_forward.1} parent=11 // pred_check_branch
        %223 = sbr.rel (%p221) target = $region36
      $region35: #{tpro_forward.1} parent=11 // pred_region
        _
      $region36: #{tpro_forward.1} parent=11 // pred_fallthru
        _
    $region12: #{tpro_forward.1} parent=5 // pred_fallthru
      _
    %p224 = scmp.lt.s32.totalorder %s13, 2
    // Predicated region
    $region37: #{tpro_forward.1} parent=5 // pred_check
      %p225 = pneg %p224
    $region38: #{tpro_forward.1} parent=5 // pred_check_branch
      %227 = sbr.rel (%p225) target = $region40
    $region39: #{tpro_forward.1} parent=5 // pred_region
      // Predicated region
      $region41: #{tpro_forward.1} parent=39 // pred_check
        %p228 = pneg %p33
      $region42: #{tpro_forward.1} parent=39 // pred_check_branch
        %230 = sbr.rel (%p228) target = $region44
      $region43: #{tpro_forward.1} parent=39 // pred_region
        %s231 = smul.u32 2, %s13
        %p232 = scmp.lt.s32.totalorder %s231, 3
        %s233 = scalar_select %p232, %s231, 3
        %s234 = smul.addr %s233, 2
        %s235 = smul.addr %s234, 8
        %s236 = scalar_lea.vmem %s0, %s235
        %s237 = smul.u32 2, %s13
      $region44: #{tpro_forward.1} parent=39 // pred_fallthru
        _
    $region40: #{tpro_forward.1} parent=5 // pred_fallthru
      _
    %p238 = scmp.le.s32.totalorder 1, %s13
    %p239 = scmp.lt.s32.totalorder %s13, 3
    %p240 = pnand %p238, %p239
    %p241 = pneg %p240
    // Predicated region
    $region45: #{tpro_forward.1} parent=5 // pred_check
      _
    $region46: #{tpro_forward.1} parent=5 // pred_check_branch
      %243 = sbr.rel (%p240) target = $region48
    $region47: #{tpro_forward.1} parent=5 // pred_region
      %s244 = ssub.s32 %s13, 1
      %s245 = smul.u32 2, %s18
      %p246 = scmp.lt.s32.totalorder %s245, 3
      %s247 = scalar_select %p246, %s245, 3
      %s248 = smul.addr %s247, 2
      %s249 = smul.addr %s248, 8
      %s250 = scalar_lea.vmem %s0, %s249
      %p251 = pneg %p39
      %p252 = pneg %p36
      %p253 = pneg %p60
      %p254 = pneg %p57
      %p255 = pneg %p81
      %p256 = pneg %p78
      %p257 = pneg %p102
      %p258 = pneg %p99
      %p259 = pneg %p123
      %p260 = pneg %p120
      %p261 = pneg %p144
      %p262 = pneg %p141
      %p263 = pneg %p165
      %p264 = pneg %p162
      %p265 = pneg %p191
      %p266 = pneg %p188
      %s267 = smul.u32 2, %s18
      %p268 = scmp.lt.s32.totalorder %s267, 3
      %s269 = scalar_select %p268, %s267, 3
      %s270 = smul.addr %s269, 2
      %s271 = smul.addr %s270, 8
      %s272 = scalar_lea.vmem %s7, %s271
      %s273 = smul.u32 2, %s18
      %p274 = scmp.lt.s32.totalorder %s273, 3
      %s275 = scalar_select %p274, %s273, 3
      %s276 = smul.addr %s275, 2
      %s277 = smul.addr %s276, 8
      %s278 = scalar_lea.vmem %s0, %s277
      %s279 = smul.u32 2, %s18
      %s280 = smul.u32 2, %s18
      %p281 = scmp.lt.s32.totalorder %s280, 3
      %s282 = scalar_select %p281, %s280, 3
      %s283 = smul.addr %s282, 2
      %s284 = smul.addr %s283, 8
      %s285 = scalar_lea.vmem %s7, %s284
      %s286 = smul.u32 2, %s18
      %v287 = vld [vmem:[%s278] sm:$0xff]
      %v288 = vld [vmem:[%s278 + $0x8] sm:$0xff]
      %v289 = vld [vmem:[%s278 + $0x10] sm:$0xff]
      %v290 = vld [vmem:[%s278 + $0x18] sm:$0xff]
      %v291 = vpack.c.bf16 %v289, %v287
      %v292 = vpack.c.bf16 %v290, %v288
      %v293 = vld [vmem:[%s1] sm:$0xff]
      %v294 = vld [vmem:[%s1 + $0x8] sm:$0xff]
      %v295 = vld [vmem:[%s1 + $0x10] sm:$0xff]
      %v296 = vld [vmem:[%s1 + $0x18] sm:$0xff]
      %v297 = vld [vmem:[%s1 + $0x20] sm:$0xff]
      %v298 = vld [vmem:[%s1 + $0x28] sm:$0xff]
      %v299 = vld [vmem:[%s1 + $0x30] sm:$0xff]
      %v300 = vld [vmem:[%s1 + $0x38] sm:$0xff]
      %v301 = vld [vmem:[%s1 + $0x40] sm:$0xff]
      %v302 = vld [vmem:[%s1 + $0x48] sm:$0xff]
      %v303 = vld [vmem:[%s1 + $0x50] sm:$0xff]
      %v304 = vld [vmem:[%s1 + $0x58] sm:$0xff]
      %v305 = vld [vmem:[%s1 + $0x60] sm:$0xff]
      %v306 = vld [vmem:[%s1 + $0x68] sm:$0xff]
      %v307 = vld [vmem:[%s1 + $0x70] sm:$0xff]
      %v308 = vld [vmem:[%s1 + $0x78] sm:$0xff]
      %v309 = vld [vmem:[%s1 + $0x80] sm:$0xff]
      %v310 = vld [vmem:[%s1 + $0x88] sm:$0xff]
      %v311 = vld [vmem:[%s1 + $0x90] sm:$0xff]
      %v312 = vld [vmem:[%s1 + $0x98] sm:$0xff]
      %v313 = vld [vmem:[%s1 + $0xa0] sm:$0xff]
      %v314 = vld [vmem:[%s1 + $0xa8] sm:$0xff]
      %v315 = vld [vmem:[%s1 + $0xb0] sm:$0xff]
      %v316 = vld [vmem:[%s1 + $0xb8] sm:$0xff]
      %v317 = vld [vmem:[%s1 + $0xc0] sm:$0xff]
      %v318 = vld [vmem:[%s1 + $0xc8] sm:$0xff]
      %v319 = vld [vmem:[%s1 + $0xd0] sm:$0xff]
      %v320 = vld [vmem:[%s1 + $0xd8] sm:$0xff]
      %v321 = vld [vmem:[%s1 + $0xe0] sm:$0xff]
      %v322 = vld [vmem:[%s1 + $0xe8] sm:$0xff]
      %v323 = vld [vmem:[%s1 + $0xf0] sm:$0xff]
      %v324 = vld [vmem:[%s1 + $0xf8] sm:$0xff]
      %v357 = vunpack.c.l.b16 %v293
      %v358 = vunpack.c.h.b16 %v293
      %v359 = vunpack.c.l.b16 %v294
      %v360 = vunpack.c.h.b16 %v294
      %v361 = vunpack.c.l.b16 %v295
      %v362 = vunpack.c.h.b16 %v295
      %v363 = vunpack.c.l.b16 %v296
      %v364 = vunpack.c.h.b16 %v296
      %v365 = vunpack.c.l.b16 %v297
      %v366 = vunpack.c.h.b16 %v297
      %v367 = vunpack.c.l.b16 %v298
      %v368 = vunpack.c.h.b16 %v298
      %v369 = vunpack.c.l.b16 %v299
      %v370 = vunpack.c.h.b16 %v299
      %v371 = vunpack.c.l.b16 %v300
      %v372 = vunpack.c.h.b16 %v300
      %v373 = vunpack.c.l.b16 %v301
      %v374 = vunpack.c.h.b16 %v301
      %v375 = vunpack.c.l.b16 %v302
      %v376 = vunpack.c.h.b16 %v302
      %v377 = vunpack.c.l.b16 %v303
      %v378 = vunpack.c.h.b16 %v303
      %v379 = vunpack.c.l.b16 %v304
      %v380 = vunpack.c.h.b16 %v304
      %v381 = vunpack.c.l.b16 %v305
      %v382 = vunpack.c.h.b16 %v305
      %v383 = vunpack.c.l.b16 %v306
      %v384 = vunpack.c.h.b16 %v306
      %v385 = vunpack.c.l.b16 %v307
      %v386 = vunpack.c.h.b16 %v307
      %v387 = vunpack.c.l.b16 %v308
      %v388 = vunpack.c.h.b16 %v308
      %v389 = vunpack.c.l.b16 %v309
      %v390 = vunpack.c.h.b16 %v309
      %v391 = vunpack.c.l.b16 %v310
      %v392 = vunpack.c.h.b16 %v310
      %v393 = vunpack.c.l.b16 %v311
      %v394 = vunpack.c.h.b16 %v311
      %v395 = vunpack.c.l.b16 %v312
      %v396 = vunpack.c.h.b16 %v312
      %v397 = vunpack.c.l.b16 %v313
      %v398 = vunpack.c.h.b16 %v313
      %v399 = vunpack.c.l.b16 %v314
      %v400 = vunpack.c.h.b16 %v314
      %v401 = vunpack.c.l.b16 %v315
      %v402 = vunpack.c.h.b16 %v315
      %v403 = vunpack.c.l.b16 %v316
      %v404 = vunpack.c.h.b16 %v316
      %v405 = vunpack.c.l.b16 %v317
      %v406 = vunpack.c.h.b16 %v317
      %v407 = vunpack.c.l.b16 %v318
      %v408 = vunpack.c.h.b16 %v318
      %v409 = vunpack.c.l.b16 %v319
      %v410 = vunpack.c.h.b16 %v319
      %v411 = vunpack.c.l.b16 %v320
      %v412 = vunpack.c.h.b16 %v320
      %v413 = vunpack.c.l.b16 %v321
      %v414 = vunpack.c.h.b16 %v321
      %v415 = vunpack.c.l.b16 %v322
      %v416 = vunpack.c.h.b16 %v322
      %v417 = vunpack.c.l.b16 %v323
      %v418 = vunpack.c.h.b16 %v323
      %v419 = vunpack.c.l.b16 %v324
      %v420 = vunpack.c.h.b16 %v324
      %v421 = vpack.c.b16 %v359, %v357
      %v422 = vpack.c.b16 %v360, %v358
      %v423 = vpack.c.b16 %v363, %v361
      %v424 = vpack.c.b16 %v364, %v362
      %v425 = vpack.c.b16 %v367, %v365
      %v426 = vpack.c.b16 %v368, %v366
      %v427 = vpack.c.b16 %v371, %v369
      %v428 = vpack.c.b16 %v372, %v370
      %v429 = vpack.c.b16 %v375, %v373
      %v430 = vpack.c.b16 %v376, %v374
      %v431 = vpack.c.b16 %v379, %v377
      %v432 = vpack.c.b16 %v380, %v378
      %v433 = vpack.c.b16 %v383, %v381
      %v434 = vpack.c.b16 %v384, %v382
      %v435 = vpack.c.b16 %v387, %v385
      %v436 = vpack.c.b16 %v388, %v386
      %v437 = vpack.c.b16 %v391, %v389
      %v438 = vpack.c.b16 %v392, %v390
      %v439 = vpack.c.b16 %v395, %v393
      %v440 = vpack.c.b16 %v396, %v394
      %v441 = vpack.c.b16 %v399, %v397
      %v442 = vpack.c.b16 %v400, %v398
      %v443 = vpack.c.b16 %v403, %v401
      %v444 = vpack.c.b16 %v404, %v402
      %v445 = vpack.c.b16 %v407, %v405
      %v446 = vpack.c.b16 %v408, %v406
      %v447 = vpack.c.b16 %v411, %v409
      %v448 = vpack.c.b16 %v412, %v410
      %v449 = vpack.c.b16 %v415, %v413
      %v450 = vpack.c.b16 %v416, %v414
      %v451 = vpack.c.b16 %v419, %v417
      %v452 = vpack.c.b16 %v420, %v418
      %485 = vmatprep.subr.bf16.mxu0 %v436
      %486 = vmatpush1.bf16.msra.mxu0 %v435
      %487 = vmatprep.subr.bf16.mxu0 %v434
      %488 = vmatpush1.bf16.msra.mxu0 %v433
      %489 = vmatprep.subr.bf16.mxu0 %v432
      %490 = vmatpush1.bf16.msra.mxu0 %v431
      %491 = vmatprep.subr.bf16.mxu0 %v430
      %492 = vmatpush1.bf16.msra.mxu0 %v429
      %493 = vmatprep.subr.bf16.mxu0 %v428
      %494 = vmatpush1.bf16.msra.mxu0 %v427
      %495 = vmatprep.subr.bf16.mxu0 %v426
      %496 = vmatpush1.bf16.msra.mxu0 %v425
      %497 = vmatprep.subr.bf16.mxu0 %v424
      %498 = vmatpush1.bf16.msra.mxu0 %v423
      %499 = vmatprep.subr.bf16.mxu0 %v422
      %500 = vmatpush1.bf16.msra.mxu0 %v421
      %501 = vmatprep.subr.bf16.mxu0 %v452
      %502 = vmatpush2.bf16.msra.mxu0 %v451
      %503 = vmatprep.subr.bf16.mxu0 %v450
      %504 = vmatpush2.bf16.msra.mxu0 %v449
      %505 = vmatprep.subr.bf16.mxu0 %v448
      %506 = vmatpush2.bf16.msra.mxu0 %v447
      %507 = vmatprep.subr.bf16.mxu0 %v446
      %508 = vmatpush2.bf16.msra.mxu0 %v445
      %509 = vmatprep.subr.bf16.mxu0 %v444
      %510 = vmatpush2.bf16.msra.mxu0 %v443
      %511 = vmatprep.subr.bf16.mxu0 %v442
      %512 = vmatpush2.bf16.msra.mxu0 %v441
      %513 = vmatprep.subr.bf16.mxu0 %v440
      %514 = vmatpush2.bf16.msra.mxu0 %v439
      %515 = vmatprep.subr.bf16.mxu0 %v438
      %516 = vmatpush2.bf16.msra.mxu0 %v437
      %517 = vmatprep.mubr.bf16.mxu0 %v292
      %518 = vmatmul.mubr.bf16.gmra.mxu0 %v291
      %v519 = vpop.f32.mrf.mxu0
      %v520 = vadd.f32 0.0, %v519
      %v521 = vpop.f32.mrf.mxu0
      %v522 = vadd.f32 0.0, %v521
      %v523 = vpop.f32.mrf.mxu0
      %v524 = vadd.f32 0.0, %v523
      %v525 = vpop.f32.mrf.mxu0
      %v526 = vadd.f32 0.0, %v525
      %527 = vdwg.mxu0
      %v528 = vld [vmem:[%s2] sm:$0x3]
      %v530 = vlaneseq
      %v531 = vshrl.u32 %v530, 7
      %v532 = vsub.s32 0, %v531
      %v533 = vrot.slane %v528, %v532
      %v534 = vlaneseq
      %v535 = vshrl.u32 %v534, 7
      %v536 = vsub.s32 1, %v535
      %v537 = vrot.slane %v528, %v536
      %v540 = vmul.f32 %v520, %v533
      %v541 = vmul.f32 %v522, %v537
      %v542 = vmul.f32 %v524, %v533
      %v543 = vmul.f32 %v526, %v537
      %v544 = vld [vmem:[%s3] sm:$0x3]
      %v546 = vlaneseq
      %v547 = vshrl.u32 %v546, 7
      %v548 = vsub.s32 0, %v547
      %v549 = vrot.slane %v544, %v548
      %v550 = vlaneseq
      %v551 = vshrl.u32 %v550, 7
      %v552 = vsub.s32 1, %v551
      %v553 = vrot.slane %v544, %v552
      %v556 = vadd.f32 %v540, %v549
      %v557 = vadd.f32 %v541, %v553
      %v558 = vadd.f32 %v542, %v549
      %v559 = vadd.f32 %v543, %v553
      %v560 = vmax.f32 %v556, 0.0
      %v561 = vmax.f32 %v557, 0.0
      %v562 = vmax.f32 %v558, 0.0
      %v563 = vmax.f32 %v559, 0.0
      %v564 = vpack.c.bf16 %v562, %v560
      %v565 = vpack.c.bf16 %v563, %v561
      %v566 = vld [vmem:[%s4] sm:$0xff]
      %v567 = vld [vmem:[%s4 + $0x8] sm:$0xff]
      %v568 = vld [vmem:[%s4 + $0x10] sm:$0xff]
      %v569 = vld [vmem:[%s4 + $0x18] sm:$0xff]
      %v570 = vld [vmem:[%s4 + $0x20] sm:$0xff]
      %v571 = vld [vmem:[%s4 + $0x28] sm:$0xff]
      %v572 = vld [vmem:[%s4 + $0x30] sm:$0xff]
      %v573 = vld [vmem:[%s4 + $0x38] sm:$0xff]
      %v574 = vld [vmem:[%s4 + $0x40] sm:$0xff]
      %v575 = vld [vmem:[%s4 + $0x48] sm:$0xff]
      %v576 = vld [vmem:[%s4 + $0x50] sm:$0xff]
      %v577 = vld [vmem:[%s4 + $0x58] sm:$0xff]
      %v578 = vld [vmem:[%s4 + $0x60] sm:$0xff]
      %v579 = vld [vmem:[%s4 + $0x68] sm:$0xff]
      %v580 = vld [vmem:[%s4 + $0x70] sm:$0xff]
      %v581 = vld [vmem:[%s4 + $0x78] sm:$0xff]
      %v582 = vld [vmem:[%s4 + $0x80] sm:$0xff]
      %v583 = vld [vmem:[%s4 + $0x88] sm:$0xff]
      %v584 = vld [vmem:[%s4 + $0x90] sm:$0xff]
      %v585 = vld [vmem:[%s4 + $0x98] sm:$0xff]
      %v586 = vld [vmem:[%s4 + $0xa0] sm:$0xff]
      %v587 = vld [vmem:[%s4 + $0xa8] sm:$0xff]
      %v588 = vld [vmem:[%s4 + $0xb0] sm:$0xff]
      %v589 = vld [vmem:[%s4 + $0xb8] sm:$0xff]
      %v590 = vld [vmem:[%s4 + $0xc0] sm:$0xff]
      %v591 = vld [vmem:[%s4 + $0xc8] sm:$0xff]
      %v592 = vld [vmem:[%s4 + $0xd0] sm:$0xff]
      %v593 = vld [vmem:[%s4 + $0xd8] sm:$0xff]
      %v594 = vld [vmem:[%s4 + $0xe0] sm:$0xff]
      %v595 = vld [vmem:[%s4 + $0xe8] sm:$0xff]
      %v596 = vld [vmem:[%s4 + $0xf0] sm:$0xff]
      %v597 = vld [vmem:[%s4 + $0xf8] sm:$0xff]
      %v630 = vunpack.c.l.b16 %v566
      %v631 = vunpack.c.h.b16 %v566
      %v632 = vunpack.c.l.b16 %v567
      %v633 = vunpack.c.h.b16 %v567
      %v634 = vunpack.c.l.b16 %v568
      %v635 = vunpack.c.h.b16 %v568
      %v636 = vunpack.c.l.b16 %v569
      %v637 = vunpack.c.h.b16 %v569
      %v638 = vunpack.c.l.b16 %v570
      %v639 = vunpack.c.h.b16 %v570
      %v640 = vunpack.c.l.b16 %v571
      %v641 = vunpack.c.h.b16 %v571
      %v642 = vunpack.c.l.b16 %v572
      %v643 = vunpack.c.h.b16 %v572
      %v644 = vunpack.c.l.b16 %v573
      %v645 = vunpack.c.h.b16 %v573
      %v646 = vunpack.c.l.b16 %v574
      %v647 = vunpack.c.h.b16 %v574
      %v648 = vunpack.c.l.b16 %v575
      %v649 = vunpack.c.h.b16 %v575
      %v650 = vunpack.c.l.b16 %v576
      %v651 = vunpack.c.h.b16 %v576
      %v652 = vunpack.c.l.b16 %v577
      %v653 = vunpack.c.h.b16 %v577
      %v654 = vunpack.c.l.b16 %v578
      %v655 = vunpack.c.h.b16 %v578
      %v656 = vunpack.c.l.b16 %v579
      %v657 = vunpack.c.h.b16 %v579
      %v658 = vunpack.c.l.b16 %v580
      %v659 = vunpack.c.h.b16 %v580
      %v660 = vunpack.c.l.b16 %v581
      %v661 = vunpack.c.h.b16 %v581
      %v662 = vunpack.c.l.b16 %v582
      %v663 = vunpack.c.h.b16 %v582
      %v664 = vunpack.c.l.b16 %v583
      %v665 = vunpack.c.h.b16 %v583
      %v666 = vunpack.c.l.b16 %v584
      %v667 = vunpack.c.h.b16 %v584
      %v668 = vunpack.c.l.b16 %v585
      %v669 = vunpack.c.h.b16 %v585
      %v670 = vunpack.c.l.b16 %v586
      %v671 = vunpack.c.h.b16 %v586
      %v672 = vunpack.c.l.b16 %v587
      %v673 = vunpack.c.h.b16 %v587
      %v674 = vunpack.c.l.b16 %v588
      %v675 = vunpack.c.h.b16 %v588
      %v676 = vunpack.c.l.b16 %v589
      %v677 = vunpack.c.h.b16 %v589
      %v678 = vunpack.c.l.b16 %v590
      %v679 = vunpack.c.h.b16 %v590
      %v680 = vunpack.c.l.b16 %v591
      %v681 = vunpack.c.h.b16 %v591
      %v682 = vunpack.c.l.b16 %v592
      %v683 = vunpack.c.h.b16 %v592
      %v684 = vunpack.c.l.b16 %v593
      %v685 = vunpack.c.h.b16 %v593
      %v686 = vunpack.c.l.b16 %v594
      %v687 = vunpack.c.h.b16 %v594
      %v688 = vunpack.c.l.b16 %v595
      %v689 = vunpack.c.h.b16 %v595
      %v690 = vunpack.c.l.b16 %v596
      %v691 = vunpack.c.h.b16 %v596
      %v692 = vunpack.c.l.b16 %v597
      %v693 = vunpack.c.h.b16 %v597
      %v694 = vpack.c.b16 %v632, %v630
      %v695 = vpack.c.b16 %v633, %v631
      %v696 = vpack.c.b16 %v636, %v634
      %v697 = vpack.c.b16 %v637, %v635
      %v698 = vpack.c.b16 %v640, %v638
      %v699 = vpack.c.b16 %v641, %v639
      %v700 = vpack.c.b16 %v644, %v642
      %v701 = vpack.c.b16 %v645, %v643
      %v702 = vpack.c.b16 %v648, %v646
      %v703 = vpack.c.b16 %v649, %v647
      %v704 = vpack.c.b16 %v652, %v650
      %v705 = vpack.c.b16 %v653, %v651
      %v706 = vpack.c.b16 %v656, %v654
      %v707 = vpack.c.b16 %v657, %v655
      %v708 = vpack.c.b16 %v660, %v658
      %v709 = vpack.c.b16 %v661, %v659
      %v710 = vpack.c.b16 %v664, %v662
      %v711 = vpack.c.b16 %v665, %v663
      %v712 = vpack.c.b16 %v668, %v666
      %v713 = vpack.c.b16 %v669, %v667
      %v714 = vpack.c.b16 %v672, %v670
      %v715 = vpack.c.b16 %v673, %v671
      %v716 = vpack.c.b16 %v676, %v674
      %v717 = vpack.c.b16 %v677, %v675
      %v718 = vpack.c.b16 %v680, %v678
      %v719 = vpack.c.b16 %v681, %v679
      %v720 = vpack.c.b16 %v684, %v682
      %v721 = vpack.c.b16 %v685, %v683
      %v722 = vpack.c.b16 %v688, %v686
      %v723 = vpack.c.b16 %v689, %v687
      %v724 = vpack.c.b16 %v692, %v690
      %v725 = vpack.c.b16 %v693, %v691
      %758 = vmatprep.subr.bf16.mxu0 %v709
      %759 = vmatpush1.bf16.msra.mxu0 %v708
      %760 = vmatprep.subr.bf16.mxu0 %v707
      %761 = vmatpush1.bf16.msra.mxu0 %v706
      %762 = vmatprep.subr.bf16.mxu0 %v705
      %763 = vmatpush1.bf16.msra.mxu0 %v704
      %764 = vmatprep.subr.bf16.mxu0 %v703
      %765 = vmatpush1.bf16.msra.mxu0 %v702
      %766 = vmatprep.subr.bf16.mxu0 %v701
      %767 = vmatpush1.bf16.msra.mxu0 %v700
      %768 = vmatprep.subr.bf16.mxu0 %v699
      %769 = vmatpush1.bf16.msra.mxu0 %v698
      %770 = vmatprep.subr.bf16.mxu0 %v697
      %771 = vmatpush1.bf16.msra.mxu0 %v696
      %772 = vmatprep.subr.bf16.mxu0 %v695
      %773 = vmatpush1.bf16.msra.mxu0 %v694
      %774 = vmatprep.subr.bf16.mxu0 %v725
      %775 = vmatpush2.bf16.msra.mxu0 %v724
      %776 = vmatprep.subr.bf16.mxu0 %v723
      %777 = vmatpush2.bf16.msra.mxu0 %v722
      %778 = vmatprep.subr.bf16.mxu0 %v721
      %779 = vmatpush2.bf16.msra.mxu0 %v720
      %780 = vmatprep.subr.bf16.mxu0 %v719
      %781 = vmatpush2.bf16.msra.mxu0 %v718
      %782 = vmatprep.subr.bf16.mxu0 %v717
      %783 = vmatpush2.bf16.msra.mxu0 %v716
      %784 = vmatprep.subr.bf16.mxu0 %v715
      %785 = vmatpush2.bf16.msra.mxu0 %v714
      %786 = vmatprep.subr.bf16.mxu0 %v713
      %787 = vmatpush2.bf16.msra.mxu0 %v712
      %788 = vmatprep.subr.bf16.mxu0 %v711
      %789 = vmatpush2.bf16.msra.mxu0 %v710
      %790 = vmatprep.mubr.bf16.mxu0 %v565
      %791 = vmatmul.mubr.bf16.gmra.mxu0 %v564
      %v792 = vpop.f32.mrf.mxu0
      %v793 = vadd.f32 0.0, %v792
      %v794 = vpop.f32.mrf.mxu0
      %v795 = vadd.f32 0.0, %v794
      %v796 = vpop.f32.mrf.mxu0
      %v797 = vadd.f32 0.0, %v796
      %v798 = vpop.f32.mrf.mxu0
      %v799 = vadd.f32 0.0, %v798
      %800 = vdwg.mxu0
      %v801 = vld [vmem:[%s5] sm:$0x3]
      %v803 = vlaneseq
      %v804 = vshrl.u32 %v803, 7
      %v805 = vsub.s32 0, %v804
      %v806 = vrot.slane %v801, %v805
      %v807 = vlaneseq
      %v808 = vshrl.u32 %v807, 7
      %v809 = vsub.s32 1, %v808
      %v810 = vrot.slane %v801, %v809
      %v813 = vmul.f32 %v793, %v806
      %v814 = vmul.f32 %v795, %v810
      %v815 = vmul.f32 %v797, %v806
      %v816 = vmul.f32 %v799, %v810
      %v817 = vld [vmem:[%s6] sm:$0x3]
      %v819 = vlaneseq
      %v820 = vshrl.u32 %v819, 7
      %v821 = vsub.s32 0, %v820
      %v822 = vrot.slane %v817, %v821
      %v823 = vlaneseq
      %v824 = vshrl.u32 %v823, 7
      %v825 = vsub.s32 1, %v824
      %v826 = vrot.slane %v817, %v825
      %v829 = vadd.f32 %v813, %v822
      %v830 = vadd.f32 %v814, %v826
      %v831 = vadd.f32 %v815, %v822
      %v832 = vadd.f32 %v816, %v826
      %v833 = vmax.f32 %v829, 0.0
      %v834 = vmax.f32 %v830, 0.0
      %v835 = vmax.f32 %v831, 0.0
      %v836 = vmax.f32 %v832, 0.0
      %837 = vst [vmem:[%s285] sm:$0xff] %v833
      %838 = vst [vmem:[%s285 + $0x8] sm:$0xff] %v834
      %839 = vst [vmem:[%s285 + $0x10] sm:$0xff] %v835
      %840 = vst [vmem:[%s285 + $0x18] sm:$0xff] %v836
      %s841 = smul.u32 2, %s18
      %p842 = scmp.lt.s32.totalorder %s841, 3
      %s843 = scalar_select %p842, %s841, 3
      %s844 = smul.addr %s843, 2
      %s845 = smul.addr %s844, 8
      %s846 = scalar_lea.vmem %s7, %s845
      // Predicated region
      $region49: #{tpro_forward.1} parent=47 // pred_check
        %p847 = pneg %p188
      $region50: #{tpro_forward.1} parent=47 // pred_check_branch
        %849 = sbr.rel (%p847) target = $region52
      $region51: #{tpro_forward.1} parent=47 // pred_region
        %s850 = smul.u32 2, %s18
      $region52: #{tpro_forward.1} parent=47 // pred_fallthru
        _
    $region48: #{tpro_forward.1} parent=5 // pred_fallthru
      _
    %p851 = scmp.le.s32.totalorder 2, %s13
    // Predicated region
    $region53: #{tpro_forward.1} parent=5 // pred_check
      %p852 = pneg %p851
    $region54: #{tpro_forward.1} parent=5 // pred_check_branch
      %854 = sbr.rel (%p852) target = $region56
    $region55: #{tpro_forward.1} parent=5 // pred_region
      %s855 = ssub.s32 %s13, 2
      // Predicated region
      $region57: #{tpro_forward.1} parent=55 // pred_check
        %p856 = pneg %p194
      $region58: #{tpro_forward.1} parent=55 // pred_check_branch
        %858 = sbr.rel (%p856) target = $region60
      $region59: #{tpro_forward.1} parent=55 // pred_region
        %s859 = smul.u32 2, %s19
        %p860 = scmp.lt.s32.totalorder %s859, 3
        %s861 = scalar_select %p860, %s859, 3
        %s862 = smul.addr %s861, 2
        %s863 = smul.addr %s862, 8
        %s864 = scalar_lea.vmem %s7, %s863
      $region60: #{tpro_forward.1} parent=55 // pred_fallthru
        _
    $region56: #{tpro_forward.1} parent=5 // pred_fallthru
      _
  $region6: #{tpro_forward.1} parent=0 // loop_footer
    %s17 = sadd.s32 1, %s13
  $region7: #{tpro_forward.1} parent=0 // loop_footer_branch
    %12 = sbr.rel target = $region3
  $region8: #{tpro_forward.1} parent=0 // loop_exit
    _

// kernel: tile.17
$region0: #{tile.17}
  #allocation0 [shape = 's32[1]{0}', space=sflag, size = 0x4, scoped, tag = 'scoped memory for tile.17']
  %s0 = inlined_call_operand.vmem [shape: f32[32], index: 0, kind: input, shape index: {}]
  %s1 = inlined_call_operand.vmem [shape: f32[8,32], index: 1, kind: output, shape index: {}]
  // Predicated region
  $region2: #{tile.17} parent=0 // pred_check
    _
  $region3: #{tile.17} parent=0 // pred_check_branch
    %3 = sbr.rel (0) target = $region5
  $region4: #{tile.17} parent=0 // pred_region
    _
  $region5: #{tile.17} parent=0 // pred_fallthru
    _
  %v4 = vld [vmem:[%s0] ss:$0 sm:$0xff]
  %5 = vst [vmem:[%s1] sm:$0xff] %v4

// kernel: tile.19
$region0: #{tile.19}
  %s0 = inlined_call_operand.vmem [shape: f32[8,32], index: 0, kind: input, shape index: {}]
  %s1 = inlined_call_operand.vmem [shape: f32[1,256], index: 1, kind: output, shape index: {}]
  $region1: #{tile.19} parent=0
    #allocation0 [shape = 'u8[8192]{0}', space=vmem, size = 0x2000, scoped, tag = 'scoped mem for output reshape']
    %s2 = smov 3
    %v3 = vld [vmem:[%s0] ss:$4 sm:%s2]
    %vm4 = vcmask 261120
    %5 = vst.msk [vmem:[#allocation0] ss:$8 sm:$0x3] %vm4, %v3
    %s6 = scalar_lea.vmem %s0, 3
    %s7 = smov 3
    %v8 = vld [vmem:[%s6] ss:$4 sm:%s7]
    %9 = vrot.lane.b32.xlu0 %v8, 96
    %v10 = vpop.permute.xlu0 %9
    %vm11 = vcmask 1048320
    %12 = vst.msk [vmem:[#allocation0] ss:$8 sm:$0x3] %vm11, %v10
    %s13 = scalar_lea.vmem %s0, 2
    %s14 = smov 3
    %v15 = vld [vmem:[%s13] ss:$4 sm:%s14]
    %16 = vrot.lane.b32.xlu0 %v15, 64
    %v17 = vpop.permute.xlu0 %16
    %vm18 = vcmask 785920
    %19 = vst.msk [vmem:[#allocation0] ss:$8 sm:$0x3] %vm18, %v17
    %s20 = scalar_lea.vmem %s0, 1
    %s21 = smov 3
    %v22 = vld [vmem:[%s20] ss:$4 sm:%s21]
    %23 = vrot.lane.b32.xlu0 %v22, 32
    %v24 = vpop.permute.xlu0 %23
    %vm25 = vcmask 523520
    %26 = vst.msk [vmem:[#allocation0] ss:$8 sm:$0x3] %vm25, %v24
    %s28 = sshll.u32 1, 1
    %s29 = ssub.s32 %s28, 1
    %v31 = vld [vmem:[#allocation0] sm:%s29]
    %s32 = sshll.u32 1, 1
    %s33 = ssub.s32 %s32, 1
    %34 = vst [vmem:[%s1] sm:%s33] %v31
    %s35 = scalar_lea.vmem [#allocation0], 8
    %v36 = vld [vmem:[%s35] sm:%s29]
    %s37 = sshll.u32 1, 1
    %s38 = ssub.s32 %s37, 1
    %s39 = scalar_lea.vmem %s1, 1
    %40 = vst [vmem:[%s39] sm:%s38] %v36

// kernel: tpro_forward.1
$region0: #{tpro_forward.1}
  #allocation0 [shape = 'u32[]', space=smem, size = 0x4, offset = 0x4, fixed_abs, tag = 'smem constant byte address 0x4 - core index']
  #allocation1 [shape = 'u32[144,128]{1,0:T(1,128)}', space=vmem, size = 0x12000, scoped, tag = 'internal scratch']
  %s0 = inlined_call_operand.vmem [shape: f32[32,256], index: 0, kind: input, shape index: {}]
  %s1 = inlined_call_operand.vmem [shape: bf16[256,256], index: 1, kind: input, shape index: {}]
  %s2 = inlined_call_operand.vmem [shape: f32[1,256], index: 2, kind: input, shape index: {}]
  %s3 = inlined_call_operand.vmem [shape: f32[1,256], index: 3, kind: input, shape index: {}]
  %s4 = inlined_call_operand.vmem [shape: bf16[256,256], index: 4, kind: input, shape index: {}]
  %s5 = inlined_call_operand.vmem [shape: f32[1,256], index: 5, kind: input, shape index: {}]
  %s6 = inlined_call_operand.vmem [shape: f32[1,256], index: 6, kind: input, shape index: {}]
  %s7 = inlined_call_operand.vmem [shape: f32[32,256], index: 7, kind: output, shape index: {}]
  %s8 = sld [smem:[#allocation0]]
  $region61: #{tpro_forward.1} parent=0
    _
  %s10 = ssub.s32 1, %s8
  %s11 = scalar_select 0, %s10, %s8
  loop: start=0, step=1, limit=4
  $region2: #{tpro_forward.1} parent=0 // loop_pre_header
    _
  $region3: #{tpro_forward.1} parent=0 // loop_header
    %s13 = sphi 0, %s17
    %p14 = scmp.ge.s32.totalorder %s13, 4
    %s23 = sphi 0, %s25
    %s26 = sphi 0, %s23
    %s27 = sphi 0, %s26
    %s43 = sphi 0, %s27
    %s47 = sphi 0, %s47
    %s49 = sphi 0, %s47
    %s50 = sphi 0, %s49
    %s64 = sphi 0, %s50
    %s68 = sphi 0, %s68
    %s70 = sphi 0, %s68
    %s71 = sphi 0, %s70
    %s85 = sphi 0, %s71
    %s89 = sphi 0, %s89
    %s91 = sphi 0, %s89
    %s92 = sphi 0, %s91
    %s106 = sphi 0, %s92
    %s110 = sphi 0, %s110
    %s112 = sphi 0, %s110
    %s113 = sphi 0, %s112
    %s127 = sphi 0, %s113
    %s131 = sphi 0, %s131
    %s133 = sphi 0, %s131
    %s134 = sphi 0, %s133
    %s148 = sphi 0, %s134
    %s152 = sphi 0, %s152
    %s154 = sphi 0, %s152
    %s155 = sphi 0, %s154
    %s169 = sphi 0, %s155
    %s175 = sphi 0, %s177
    %s178 = sphi 0, %s175
    %s179 = sphi 0, %s178
    %s195 = sphi 0, %s179
  $region4: #{tpro_forward.1} parent=0 // loop_header_branch
    %16 = sbr.rel (%p14) target = $region8
  $region5: #{tpro_forward.1} parent=0 // loop_body
    %s18 = ssub.s32 %s13, 1
    %s19 = ssub.s32 %s13, 2
    %s20 = sadd.s32 %s13, 1
    %s21 = ssub.s32 %s13, %s20
    %p22 = scmp.eq.s32.totalorder %s21, 0
    %s24 = sadd.s32 %s23, 1
    %s25 = scalar_select %p22, %s23, %s24
    %p28 = pneg %p22
    %p29 = scmp.eq.s32.totalorder %s13, 1
    %p30 = por %p28, %p29
    %p31 = scmp.ne.s32.totalorder %s23, %s26
    %p32 = scmp.eq.s32.totalorder %s13, 0
    %p33 = por %p31, %p32
    %p34 = scmp.ne.s32.totalorder %s23, %s26
    %p35 = scmp.eq.s32.totalorder %s18, 1
    %p36 = por %p34, %p35
    %p37 = scmp.ne.s32.totalorder %s26, %s27
    %p38 = scmp.eq.s32.totalorder %s18, 0
    %p39 = por %p37, %p38
    %p40 = scmp.ne.s32.totalorder %s26, %s27
    %p41 = scmp.eq.s32.totalorder %s19, 1
    %p42 = por %p40, %p41
    %p44 = scmp.ne.s32.totalorder %s27, %s43
    %p45 = scmp.eq.s32.totalorder %s19, 0
    %p46 = por %p44, %p45
    %s48 = sadd.s32 %s47, 1
    %p51 = scmp.eq.s32.totalorder %s13, 1
    %p52 = scmp.ne.s32.totalorder %s47, %s49
    %p53 = scmp.eq.s32.totalorder %s13, 0
    %p54 = por %p52, %p53
    %p55 = scmp.ne.s32.totalorder %s47, %s49
    %p56 = scmp.eq.s32.totalorder %s18, 1
    %p57 = por %p55, %p56
    %p58 = scmp.ne.s32.totalorder %s49, %s50
    %p59 = scmp.eq.s32.totalorder %s18, 0
    %p60 = por %p58, %p59
    %p61 = scmp.ne.s32.totalorder %s49, %s50
    %p62 = scmp.eq.s32.totalorder %s19, 1
    %p63 = por %p61, %p62
    %p65 = scmp.ne.s32.totalorder %s50, %s64
    %p66 = scmp.eq.s32.totalorder %s19, 0
    %p67 = por %p65, %p66
    %s69 = sadd.s32 %s68, 1
    %p72 = scmp.eq.s32.totalorder %s13, 1
    %p73 = scmp.ne.s32.totalorder %s68, %s70
    %p74 = scmp.eq.s32.totalorder %s13, 0
    %p75 = por %p73, %p74
    %p76 = scmp.ne.s32.totalorder %s68, %s70
    %p77 = scmp.eq.s32.totalorder %s18, 1
    %p78 = por %p76, %p77
    %p79 = scmp.ne.s32.totalorder %s70, %s71
    %p80 = scmp.eq.s32.totalorder %s18, 0
    %p81 = por %p79, %p80
    %p82 = scmp.ne.s32.totalorder %s70, %s71
    %p83 = scmp.eq.s32.totalorder %s19, 1
    %p84 = por %p82, %p83
    %p86 = scmp.ne.s32.totalorder %s71, %s85
    %p87 = scmp.eq.s32.totalorder %s19, 0
    %p88 = por %p86, %p87
    %s90 = sadd.s32 %s89, 1
    %p93 = scmp.eq.s32.totalorder %s13, 1
    %p94 = scmp.ne.s32.totalorder %s89, %s91
    %p95 = scmp.eq.s32.totalorder %s13, 0
    %p96 = por %p94, %p95
    %p97 = scmp.ne.s32.totalorder %s89, %s91
    %p98 = scmp.eq.s32.totalorder %s18, 1
    %p99 = por %p97, %p98
    %p100 = scmp.ne.s32.totalorder %s91, %s92
    %p101 = scmp.eq.s32.totalorder %s18, 0
    %p102 = por %p100, %p101
    %p103 = scmp.ne.s32.totalorder %s91, %s92
    %p104 = scmp.eq.s32.totalorder %s19, 1
    %p105 = por %p103, %p104
    %p107 = scmp.ne.s32.totalorder %s92, %s106
    %p108 = scmp.eq.s32.totalorder %s19, 0
    %p109 = por %p107, %p108
    %s111 = sadd.s32 %s110, 1
    %p114 = scmp.eq.s32.totalorder %s13, 1
    %p115 = scmp.ne.s32.totalorder %s110, %s112
    %p116 = scmp.eq.s32.totalorder %s13, 0
    %p117 = por %p115, %p116
    %p118 = scmp.ne.s32.totalorder %s110, %s112
    %p119 = scmp.eq.s32.totalorder %s18, 1
    %p120 = por %p118, %p119
    %p121 = scmp.ne.s32.totalorder %s112, %s113
    %p122 = scmp.eq.s32.totalorder %s18, 0
    %p123 = por %p121, %p122
    %p124 = scmp.ne.s32.totalorder %s112, %s113
    %p125 = scmp.eq.s32.totalorder %s19, 1
    %p126 = por %p124, %p125
    %p128 = scmp.ne.s32.totalorder %s113, %s127
    %p129 = scmp.eq.s32.totalorder %s19, 0
    %p130 = por %p128, %p129
    %s132 = sadd.s32 %s131, 1
    %p135 = scmp.eq.s32.totalorder %s13, 1
    %p136 = scmp.ne.s32.totalorder %s131, %s133
    %p137 = scmp.eq.s32.totalorder %s13, 0
    %p138 = por %p136, %p137
    %p139 = scmp.ne.s32.totalorder %s131, %s133
    %p140 = scmp.eq.s32.totalorder %s18, 1
    %p141 = por %p139, %p140
    %p142 = scmp.ne.s32.totalorder %s133, %s134
    %p143 = scmp.eq.s32.totalorder %s18, 0
    %p144 = por %p142, %p143
    %p145 = scmp.ne.s32.totalorder %s133, %s134
    %p146 = scmp.eq.s32.totalorder %s19, 1
    %p147 = por %p145, %p146
    %p149 = scmp.ne.s32.totalorder %s134, %s148
    %p150 = scmp.eq.s32.totalorder %s19, 0
    %p151 = por %p149, %p150
    %s153 = sadd.s32 %s152, 1
    %p156 = scmp.eq.s32.totalorder %s13, 1
    %p157 = scmp.ne.s32.totalorder %s152, %s154
    %p158 = scmp.eq.s32.totalorder %s13, 0
    %p159 = por %p157, %p158
    %p160 = scmp.ne.s32.totalorder %s152, %s154
    %p161 = scmp.eq.s32.totalorder %s18, 1
    %p162 = por %p160, %p161
    %p163 = scmp.ne.s32.totalorder %s154, %s155
    %p164 = scmp.eq.s32.totalorder %s18, 0
    %p165 = por %p163, %p164
    %p166 = scmp.ne.s32.totalorder %s154, %s155
    %p167 = scmp.eq.s32.totalorder %s19, 1
    %p168 = por %p166, %p167
    %p170 = scmp.ne.s32.totalorder %s155, %s169
    %p171 = scmp.eq.s32.totalorder %s19, 0
    %p172 = por %p170, %p171
    %s173 = ssub.s32 %s13, %s20
    %p174 = scmp.eq.s32.totalorder %s173, 0
    %s176 = sadd.s32 %s175, 1
    %s177 = scalar_select %p174, %s175, %s176
    %p180 = pneg %p174
    %p181 = scmp.eq.s32.totalorder %s13, 1
    %p182 = por %p180, %p181
    %p183 = scmp.ne.s32.totalorder %s175, %s178
    %p184 = scmp.eq.s32.totalorder %s13, 0
    %p185 = por %p183, %p184
    %p186 = scmp.ne.s32.totalorder %s175, %s178
    %p187 = scmp.eq.s32.totalorder %s18, 1
    %p188 = por %p186, %p187
    %p189 = scmp.ne.s32.totalorder %s178, %s179
    %p190 = scmp.eq.s32.totalorder %s18, 0
    %p191 = por %p189, %p190
    %p192 = scmp.ne.s32.totalorder %s178, %s179
    %p193 = scmp.eq.s32.totalorder %s19, 1
    %p194 = por %p192, %p193
    %p196 = scmp.ne.s32.totalorder %s179, %s195
    %p197 = scmp.eq.s32.totalorder %s19, 0
    %p198 = por %p196, %p197
    %p199 = scmp.le.s32.totalorder 1, %s13
    %p200 = scmp.lt.s32.totalorder %s13, 3
    %p201 = pnand %p199, %p200
    %p202 = pneg %p201
    // Predicated region
    $region9: #{tpro_forward.1} parent=5 // pred_check
      _
    $region10: #{tpro_forward.1} parent=5 // pred_check_branch
      %204 = sbr.rel (%p201) target = $region12
    $region11: #{tpro_forward.1} parent=5 // pred_region
      %s205 = ssub.s32 %s13, 1
      // Predicated region
      $region13: #{tpro_forward.1} parent=11 // pred_check
        %p206 = pneg %p60
      $region14: #{tpro_forward.1} parent=11 // pred_check_branch
        %208 = sbr.rel (%p206) target = $region16
      $region15: #{tpro_forward.1} parent=11 // pred_region
        _
      $region16: #{tpro_forward.1} parent=11 // pred_fallthru
        _
      // Predicated region
      $region17: #{tpro_forward.1} parent=11 // pred_check
        %p209 = pneg %p81
      $region18: #{tpro_forward.1} parent=11 // pred_check_branch
        %211 = sbr.rel (%p209) target = $region20
      $region19: #{tpro_forward.1} parent=11 // pred_region
        _
      $region20: #{tpro_forward.1} parent=11 // pred_fallthru
        _
      // Predicated region
      $region21: #{tpro_forward.1} parent=11 // pred_check
        %p212 = pneg %p102
      $region22: #{tpro_forward.1} parent=11 // pred_check_branch
        %214 = sbr.rel (%p212) target = $region24
      $region23: #{tpro_forward.1} parent=11 // pred_region
        _
      $region24: #{tpro_forward.1} parent=11 // pred_fallthru
        _
      // Predicated region
      $region25: #{tpro_forward.1} parent=11 // pred_check
        %p215 = pneg %p123
      $region26: #{tpro_forward.1} parent=11 // pred_check_branch
        %217 = sbr.rel (%p215) target = $region28
      $region27: #{tpro_forward.1} parent=11 // pred_region
        _
      $region28: #{tpro_forward.1} parent=11 // pred_fallthru
        _
      // Predicated region
      $region29: #{tpro_forward.1} parent=11 // pred_check
        %p218 = pneg %p144
      $region30: #{tpro_forward.1} parent=11 // pred_check_branch
        %220 = sbr.rel (%p218) target = $region32
      $region31: #{tpro_forward.1} parent=11 // pred_region
        _
      $region32: #{tpro_forward.1} parent=11 // pred_fallthru
        _
      // Predicated region
      $region33: #{tpro_forward.1} parent=11 // pred_check
        %p221 = pneg %p165
      $region34: #{tpro_forward.1} parent=11 // pred_check_branch
        %223 = sbr.rel (%p221) target = $region36
      $region35: #{tpro_forward.1} parent=11 // pred_region
        _
      $region36: #{tpro_forward.1} parent=11 // pred_fallthru
        _
    $region12: #{tpro_forward.1} parent=5 // pred_fallthru
      _
    %p224 = scmp.lt.s32.totalorder %s13, 2
    // Predicated region
    $region37: #{tpro_forward.1} parent=5 // pred_check
      %p225 = pneg %p224
    $region38: #{tpro_forward.1} parent=5 // pred_check_branch
      %227 = sbr.rel (%p225) target = $region40
    $region39: #{tpro_forward.1} parent=5 // pred_region
      // Predicated region
      $region41: #{tpro_forward.1} parent=39 // pred_check
        %p228 = pneg %p33
      $region42: #{tpro_forward.1} parent=39 // pred_check_branch
        %230 = sbr.rel (%p228) target = $region44
      $region43: #{tpro_forward.1} parent=39 // pred_region
        %s231 = smul.u32 2, %s13
        %p232 = scmp.lt.s32.totalorder %s231, 3
        %s233 = scalar_select %p232, %s231, 3
        %s234 = smul.addr %s233, 2
        %s235 = smul.addr %s234, 8
        %s236 = scalar_lea.vmem %s0, %s235
        %s237 = smul.u32 2, %s13
      $region44: #{tpro_forward.1} parent=39 // pred_fallthru
        _
    $region40: #{tpro_forward.1} parent=5 // pred_fallthru
      _
    %p238 = scmp.le.s32.totalorder 1, %s13
    %p239 = scmp.lt.s32.totalorder %s13, 3
    %p240 = pnand %p238, %p239
    %p241 = pneg %p240
    // Predicated region
    $region45: #{tpro_forward.1} parent=5 // pred_check
      _
    $region46: #{tpro_forward.1} parent=5 // pred_check_branch
      %243 = sbr.rel (%p240) target = $region48
    $region47: #{tpro_forward.1} parent=5 // pred_region
      %s244 = ssub.s32 %s13, 1
      %s245 = smul.u32 2, %s18
      %p246 = scmp.lt.s32.totalorder %s245, 3
      %s247 = scalar_select %p246, %s245, 3
      %s248 = smul.addr %s247, 2
      %s249 = smul.addr %s248, 8
      %s250 = scalar_lea.vmem %s0, %s249
      %p251 = pneg %p39
      %p252 = pneg %p36
      %p253 = pneg %p60
      %p254 = pneg %p57
      %p255 = pneg %p81
      %p256 = pneg %p78
      %p257 = pneg %p102
      %p258 = pneg %p99
      %p259 = pneg %p123
      %p260 = pneg %p120
      %p261 = pneg %p144
      %p262 = pneg %p141
      %p263 = pneg %p165
      %p264 = pneg %p162
      %p265 = pneg %p191
      %p266 = pneg %p188
      %s267 = smul.u32 2, %s18
      %p268 = scmp.lt.s32.totalorder %s267, 3
      %s269 = scalar_select %p268, %s267, 3
      %s270 = smul.addr %s269, 2
      %s271 = smul.addr %s270, 8
      %s272 = scalar_lea.vmem %s7, %s271
      %s273 = smul.u32 2, %s18
      %p274 = scmp.lt.s32.totalorder %s273, 3
      %s275 = scalar_select %p274, %s273, 3
      %s276 = smul.addr %s275, 2
      %s277 = smul.addr %s276, 8
      %s278 = scalar_lea.vmem %s0, %s277
      %s279 = smul.u32 2, %s18
      %s280 = smul.u32 2, %s18
      %p281 = scmp.lt.s32.totalorder %s280, 3
      %s282 = scalar_select %p281, %s280, 3
      %s283 = smul.addr %s282, 2
      %s284 = smul.addr %s283, 8
      %s285 = scalar_lea.vmem %s7, %s284
      %s286 = smul.u32 2, %s18
      %v287 = vld [vmem:[%s278] sm:$0xff]
      %v288 = vld [vmem:[%s278 + $0x8] sm:$0xff]
      %v289 = vld [vmem:[%s278 + $0x10] sm:$0xff]
      %v290 = vld [vmem:[%s278 + $0x18] sm:$0xff]
      %v291 = vpack.c.bf16 %v289, %v287
      %v292 = vpack.c.bf16 %v290, %v288
      %v293 = vld [vmem:[%s1] sm:$0xff]
      %v294 = vld [vmem:[%s1 + $0x8] sm:$0xff]
      %v295 = vld [vmem:[%s1 + $0x10] sm:$0xff]
      %v296 = vld [vmem:[%s1 + $0x18] sm:$0xff]
      %v297 = vld [vmem:[%s1 + $0x20] sm:$0xff]
      %v298 = vld [vmem:[%s1 + $0x28] sm:$0xff]
      %v299 = vld [vmem:[%s1 + $0x30] sm:$0xff]
      %v300 = vld [vmem:[%s1 + $0x38] sm:$0xff]
      %v301 = vld [vmem:[%s1 + $0x40] sm:$0xff]
      %v302 = vld [vmem:[%s1 + $0x48] sm:$0xff]
      %v303 = vld [vmem:[%s1 + $0x50] sm:$0xff]
      %v304 = vld [vmem:[%s1 + $0x58] sm:$0xff]
      %v305 = vld [vmem:[%s1 + $0x60] sm:$0xff]
      %v306 = vld [vmem:[%s1 + $0x68] sm:$0xff]
      %v307 = vld [vmem:[%s1 + $0x70] sm:$0xff]
      %v308 = vld [vmem:[%s1 + $0x78] sm:$0xff]
      %v309 = vld [vmem:[%s1 + $0x80] sm:$0xff]
      %v310 = vld [vmem:[%s1 + $0x88] sm:$0xff]
      %v311 = vld [vmem:[%s1 + $0x90] sm:$0xff]
      %v312 = vld [vmem:[%s1 + $0x98] sm:$0xff]
      %v313 = vld [vmem:[%s1 + $0xa0] sm:$0xff]
      %v314 = vld [vmem:[%s1 + $0xa8] sm:$0xff]
      %v315 = vld [vmem:[%s1 + $0xb0] sm:$0xff]
      %v316 = vld [vmem:[%s1 + $0xb8] sm:$0xff]
      %v317 = vld [vmem:[%s1 + $0xc0] sm:$0xff]
      %v318 = vld [vmem:[%s1 + $0xc8] sm:$0xff]
      %v319 = vld [vmem:[%s1 + $0xd0] sm:$0xff]
      %v320 = vld [vmem:[%s1 + $0xd8] sm:$0xff]
      %v321 = vld [vmem:[%s1 + $0xe0] sm:$0xff]
      %v322 = vld [vmem:[%s1 + $0xe8] sm:$0xff]
      %v323 = vld [vmem:[%s1 + $0xf0] sm:$0xff]
      %v324 = vld [vmem:[%s1 + $0xf8] sm:$0xff]
      %v357 = vunpack.c.l.b16 %v293
      %v358 = vunpack.c.h.b16 %v293
      %v359 = vunpack.c.l.b16 %v294
      %v360 = vunpack.c.h.b16 %v294
      %v361 = vunpack.c.l.b16 %v295
      %v362 = vunpack.c.h.b16 %v295
      %v363 = vunpack.c.l.b16 %v296
      %v364 = vunpack.c.h.b16 %v296
      %v365 = vunpack.c.l.b16 %v297
      %v366 = vunpack.c.h.b16 %v297
      %v367 = vunpack.c.l.b16 %v298
      %v368 = vunpack.c.h.b16 %v298
      %v369 = vunpack.c.l.b16 %v299
      %v370 = vunpack.c.h.b16 %v299
      %v371 = vunpack.c.l.b16 %v300
      %v372 = vunpack.c.h.b16 %v300
      %v373 = vunpack.c.l.b16 %v301
      %v374 = vunpack.c.h.b16 %v301
      %v375 = vunpack.c.l.b16 %v302
      %v376 = vunpack.c.h.b16 %v302
      %v377 = vunpack.c.l.b16 %v303
      %v378 = vunpack.c.h.b16 %v303
      %v379 = vunpack.c.l.b16 %v304
      %v380 = vunpack.c.h.b16 %v304
      %v381 = vunpack.c.l.b16 %v305
      %v382 = vunpack.c.h.b16 %v305
      %v383 = vunpack.c.l.b16 %v306
      %v384 = vunpack.c.h.b16 %v306
      %v385 = vunpack.c.l.b16 %v307
      %v386 = vunpack.c.h.b16 %v307
      %v387 = vunpack.c.l.b16 %v308
      %v388 = vunpack.c.h.b16 %v308
      %v389 = vunpack.c.l.b16 %v309
      %v390 = vunpack.c.h.b16 %v309
      %v391 = vunpack.c.l.b16 %v310
      %v392 = vunpack.c.h.b16 %v310
      %v393 = vunpack.c.l.b16 %v311
      %v394 = vunpack.c.h.b16 %v311
      %v395 = vunpack.c.l.b16 %v312
      %v396 = vunpack.c.h.b16 %v312
      %v397 = vunpack.c.l.b16 %v313
      %v398 = vunpack.c.h.b16 %v313
      %v399 = vunpack.c.l.b16 %v314
      %v400 = vunpack.c.h.b16 %v314
      %v401 = vunpack.c.l.b16 %v315
      %v402 = vunpack.c.h.b16 %v315
      %v403 = vunpack.c.l.b16 %v316
      %v404 = vunpack.c.h.b16 %v316
      %v405 = vunpack.c.l.b16 %v317
      %v406 = vunpack.c.h.b16 %v317
      %v407 = vunpack.c.l.b16 %v318
      %v408 = vunpack.c.h.b16 %v318
      %v409 = vunpack.c.l.b16 %v319
      %v410 = vunpack.c.h.b16 %v319
      %v411 = vunpack.c.l.b16 %v320
      %v412 = vunpack.c.h.b16 %v320
      %v413 = vunpack.c.l.b16 %v321
      %v414 = vunpack.c.h.b16 %v321
      %v415 = vunpack.c.l.b16 %v322
      %v416 = vunpack.c.h.b16 %v322
      %v417 = vunpack.c.l.b16 %v323
      %v418 = vunpack.c.h.b16 %v323
      %v419 = vunpack.c.l.b16 %v324
      %v420 = vunpack.c.h.b16 %v324
      %v421 = vpack.c.b16 %v359, %v357
      %v422 = vpack.c.b16 %v360, %v358
      %v423 = vpack.c.b16 %v363, %v361
      %v424 = vpack.c.b16 %v364, %v362
      %v425 = vpack.c.b16 %v367, %v365
      %v426 = vpack.c.b16 %v368, %v366
      %v427 = vpack.c.b16 %v371, %v369
      %v428 = vpack.c.b16 %v372, %v370
      %v429 = vpack.c.b16 %v375, %v373
      %v430 = vpack.c.b16 %v376, %v374
      %v431 = vpack.c.b16 %v379, %v377
      %v432 = vpack.c.b16 %v380, %v378
      %v433 = vpack.c.b16 %v383, %v381
      %v434 = vpack.c.b16 %v384, %v382
      %v435 = vpack.c.b16 %v387, %v385
      %v436 = vpack.c.b16 %v388, %v386
      %v437 = vpack.c.b16 %v391, %v389
      %v438 = vpack.c.b16 %v392, %v390
      %v439 = vpack.c.b16 %v395, %v393
      %v440 = vpack.c.b16 %v396, %v394
      %v441 = vpack.c.b16 %v399, %v397
      %v442 = vpack.c.b16 %v400, %v398
      %v443 = vpack.c.b16 %v403, %v401
      %v444 = vpack.c.b16 %v404, %v402
      %v445 = vpack.c.b16 %v407, %v405
      %v446 = vpack.c.b16 %v408, %v406
      %v447 = vpack.c.b16 %v411, %v409
      %v448 = vpack.c.b16 %v412, %v410
      %v449 = vpack.c.b16 %v415, %v413
      %v450 = vpack.c.b16 %v416, %v414
      %v451 = vpack.c.b16 %v419, %v417
      %v452 = vpack.c.b16 %v420, %v418
      %485 = vmatprep.subr.bf16.mxu0 %v436
      %486 = vmatpush1.bf16.msra.mxu0 %v435
      %487 = vmatprep.subr.bf16.mxu0 %v434
      %488 = vmatpush1.bf16.msra.mxu0 %v433
      %489 = vmatprep.subr.bf16.mxu0 %v432
      %490 = vmatpush1.bf16.msra.mxu0 %v431
      %491 = vmatprep.subr.bf16.mxu0 %v430
      %492 = vmatpush1.bf16.msra.mxu0 %v429
      %493 = vmatprep.subr.bf16.mxu0 %v428
      %494 = vmatpush1.bf16.msra.mxu0 %v427
      %495 = vmatprep.subr.bf16.mxu0 %v426
      %496 = vmatpush1.bf16.msra.mxu0 %v425
      %497 = vmatprep.subr.bf16.mxu0 %v424
      %498 = vmatpush1.bf16.msra.mxu0 %v423
      %499 = vmatprep.subr.bf16.mxu0 %v422
      %500 = vmatpush1.bf16.msra.mxu0 %v421
      %501 = vmatprep.subr.bf16.mxu0 %v452
      %502 = vmatpush2.bf16.msra.mxu0 %v451
      %503 = vmatprep.subr.bf16.mxu0 %v450
      %504 = vmatpush2.bf16.msra.mxu0 %v449
      %505 = vmatprep.subr.bf16.mxu0 %v448
      %506 = vmatpush2.bf16.msra.mxu0 %v447
      %507 = vmatprep.subr.bf16.mxu0 %v446
      %508 = vmatpush2.bf16.msra.mxu0 %v445
      %509 = vmatprep.subr.bf16.mxu0 %v444
      %510 = vmatpush2.bf16.msra.mxu0 %v443
      %511 = vmatprep.subr.bf16.mxu0 %v442
      %512 = vmatpush2.bf16.msra.mxu0 %v441
      %513 = vmatprep.subr.bf16.mxu0 %v440
      %514 = vmatpush2.bf16.msra.mxu0 %v439
      %515 = vmatprep.subr.bf16.mxu0 %v438
      %516 = vmatpush2.bf16.msra.mxu0 %v437
      %517 = vmatprep.mubr.bf16.mxu0 %v292
      %518 = vmatmul.mubr.bf16.gmra.mxu0 %v291
      %v519 = vpop.f32.mrf.mxu0
      %v520 = vadd.f32 0.0, %v519
      %v521 = vpop.f32.mrf.mxu0
      %v522 = vadd.f32 0.0, %v521
      %v523 = vpop.f32.mrf.mxu0
      %v524 = vadd.f32 0.0, %v523
      %v525 = vpop.f32.mrf.mxu0
      %v526 = vadd.f32 0.0, %v525
      %527 = vdwg.mxu0
      %v528 = vld [vmem:[%s2] sm:$0x3]
      %v530 = vlaneseq
      %v531 = vshrl.u32 %v530, 7
      %v532 = vsub.s32 0, %v531
      %v533 = vrot.slane %v528, %v532
      %v534 = vlaneseq
      %v535 = vshrl.u32 %v534, 7
      %v536 = vsub.s32 1, %v535
      %v537 = vrot.slane %v528, %v536
      %v540 = vmul.f32 %v520, %v533
      %v541 = vmul.f32 %v522, %v537
      %v542 = vmul.f32 %v524, %v533
      %v543 = vmul.f32 %v526, %v537
      %v544 = vld [vmem:[%s3] sm:$0x3]
      %v546 = vlaneseq
      %v547 = vshrl.u32 %v546, 7
      %v548 = vsub.s32 0, %v547
      %v549 = vrot.slane %v544, %v548
      %v550 = vlaneseq
      %v551 = vshrl.u32 %v550, 7
      %v552 = vsub.s32 1, %v551
      %v553 = vrot.slane %v544, %v552
      %v556 = vadd.f32 %v540, %v549
      %v557 = vadd.f32 %v541, %v553
      %v558 = vadd.f32 %v542, %v549
      %v559 = vadd.f32 %v543, %v553
      %v560 = vmax.f32 %v556, 0.0
      %v561 = vmax.f32 %v557, 0.0
      %v562 = vmax.f32 %v558, 0.0
      %v563 = vmax.f32 %v559, 0.0
      %v564 = vpack.c.bf16 %v562, %v560
      %v565 = vpack.c.bf16 %v563, %v561
      %v566 = vld [vmem:[%s4] sm:$0xff]
      %v567 = vld [vmem:[%s4 + $0x8] sm:$0xff]
      %v568 = vld [vmem:[%s4 + $0x10] sm:$0xff]
      %v569 = vld [vmem:[%s4 + $0x18] sm:$0xff]
      %v570 = vld [vmem:[%s4 + $0x20] sm:$0xff]
      %v571 = vld [vmem:[%s4 + $0x28] sm:$0xff]
      %v572 = vld [vmem:[%s4 + $0x30] sm:$0xff]
      %v573 = vld [vmem:[%s4 + $0x38] sm:$0xff]
      %v574 = vld [vmem:[%s4 + $0x40] sm:$0xff]
      %v575 = vld [vmem:[%s4 + $0x48] sm:$0xff]
      %v576 = vld [vmem:[%s4 + $0x50] sm:$0xff]
      %v577 = vld [vmem:[%s4 + $0x58] sm:$0xff]
      %v578 = vld [vmem:[%s4 + $0x60] sm:$0xff]
      %v579 = vld [vmem:[%s4 + $0x68] sm:$0xff]
      %v580 = vld [vmem:[%s4 + $0x70] sm:$0xff]
      %v581 = vld [vmem:[%s4 + $0x78] sm:$0xff]
      %v582 = vld [vmem:[%s4 + $0x80] sm:$0xff]
      %v583 = vld [vmem:[%s4 + $0x88] sm:$0xff]
      %v584 = vld [vmem:[%s4 + $0x90] sm:$0xff]
      %v585 = vld [vmem:[%s4 + $0x98] sm:$0xff]
      %v586 = vld [vmem:[%s4 + $0xa0] sm:$0xff]
      %v587 = vld [vmem:[%s4 + $0xa8] sm:$0xff]
      %v588 = vld [vmem:[%s4 + $0xb0] sm:$0xff]
      %v589 = vld [vmem:[%s4 + $0xb8] sm:$0xff]
      %v590 = vld [vmem:[%s4 + $0xc0] sm:$0xff]
      %v591 = vld [vmem:[%s4 + $0xc8] sm:$0xff]
      %v592 = vld [vmem:[%s4 + $0xd0] sm:$0xff]
      %v593 = vld [vmem:[%s4 + $0xd8] sm:$0xff]
      %v594 = vld [vmem:[%s4 + $0xe0] sm:$0xff]
      %v595 = vld [vmem:[%s4 + $0xe8] sm:$0xff]
      %v596 = vld [vmem:[%s4 + $0xf0] sm:$0xff]
      %v597 = vld [vmem:[%s4 + $0xf8] sm:$0xff]
      %v630 = vunpack.c.l.b16 %v566
      %v631 = vunpack.c.h.b16 %v566
      %v632 = vunpack.c.l.b16 %v567
      %v633 = vunpack.c.h.b16 %v567
      %v634 = vunpack.c.l.b16 %v568
      %v635 = vunpack.c.h.b16 %v568
      %v636 = vunpack.c.l.b16 %v569
      %v637 = vunpack.c.h.b16 %v569
      %v638 = vunpack.c.l.b16 %v570
      %v639 = vunpack.c.h.b16 %v570
      %v640 = vunpack.c.l.b16 %v571
      %v641 = vunpack.c.h.b16 %v571
      %v642 = vunpack.c.l.b16 %v572
      %v643 = vunpack.c.h.b16 %v572
      %v644 = vunpack.c.l.b16 %v573
      %v645 = vunpack.c.h.b16 %v573
      %v646 = vunpack.c.l.b16 %v574
      %v647 = vunpack.c.h.b16 %v574
      %v648 = vunpack.c.l.b16 %v575
      %v649 = vunpack.c.h.b16 %v575
      %v650 = vunpack.c.l.b16 %v576
      %v651 = vunpack.c.h.b16 %v576
      %v652 = vunpack.c.l.b16 %v577
      %v653 = vunpack.c.h.b16 %v577
      %v654 = vunpack.c.l.b16 %v578
      %v655 = vunpack.c.h.b16 %v578
      %v656 = vunpack.c.l.b16 %v579
      %v657 = vunpack.c.h.b16 %v579
      %v658 = vunpack.c.l.b16 %v580
      %v659 = vunpack.c.h.b16 %v580
      %v660 = vunpack.c.l.b16 %v581
      %v661 = vunpack.c.h.b16 %v581
      %v662 = vunpack.c.l.b16 %v582
      %v663 = vunpack.c.h.b16 %v582
      %v664 = vunpack.c.l.b16 %v583
      %v665 = vunpack.c.h.b16 %v583
      %v666 = vunpack.c.l.b16 %v584
      %v667 = vunpack.c.h.b16 %v584
      %v668 = vunpack.c.l.b16 %v585
      %v669 = vunpack.c.h.b16 %v585
      %v670 = vunpack.c.l.b16 %v586
      %v671 = vunpack.c.h.b16 %v586
      %v672 = vunpack.c.l.b16 %v587
      %v673 = vunpack.c.h.b16 %v587
      %v674 = vunpack.c.l.b16 %v588
      %v675 = vunpack.c.h.b16 %v588
      %v676 = vunpack.c.l.b16 %v589
      %v677 = vunpack.c.h.b16 %v589
      %v678 = vunpack.c.l.b16 %v590
      %v679 = vunpack.c.h.b16 %v590
      %v680 = vunpack.c.l.b16 %v591
      %v681 = vunpack.c.h.b16 %v591
      %v682 = vunpack.c.l.b16 %v592
      %v683 = vunpack.c.h.b16 %v592
      %v684 = vunpack.c.l.b16 %v593
      %v685 = vunpack.c.h.b16 %v593
      %v686 = vunpack.c.l.b16 %v594
      %v687 = vunpack.c.h.b16 %v594
      %v688 = vunpack.c.l.b16 %v595
      %v689 = vunpack.c.h.b16 %v595
      %v690 = vunpack.c.l.b16 %v596
      %v691 = vunpack.c.h.b16 %v596
      %v692 = vunpack.c.l.b16 %v597
      %v693 = vunpack.c.h.b16 %v597
      %v694 = vpack.c.b16 %v632, %v630
      %v695 = vpack.c.b16 %v633, %v631
      %v696 = vpack.c.b16 %v636, %v634
      %v697 = vpack.c.b16 %v637, %v635
      %v698 = vpack.c.b16 %v640, %v638
      %v699 = vpack.c.b16 %v641, %v639
      %v700 = vpack.c.b16 %v644, %v642
      %v701 = vpack.c.b16 %v645, %v643
      %v702 = vpack.c.b16 %v648, %v646
      %v703 = vpack.c.b16 %v649, %v647
      %v704 = vpack.c.b16 %v652, %v650
      %v705 = vpack.c.b16 %v653, %v651
      %v706 = vpack.c.b16 %v656, %v654
      %v707 = vpack.c.b16 %v657, %v655
      %v708 = vpack.c.b16 %v660, %v658
      %v709 = vpack.c.b16 %v661, %v659
      %v710 = vpack.c.b16 %v664, %v662
      %v711 = vpack.c.b16 %v665, %v663
      %v712 = vpack.c.b16 %v668, %v666
      %v713 = vpack.c.b16 %v669, %v667
      %v714 = vpack.c.b16 %v672, %v670
      %v715 = vpack.c.b16 %v673, %v671
      %v716 = vpack.c.b16 %v676, %v674
      %v717 = vpack.c.b16 %v677, %v675
      %v718 = vpack.c.b16 %v680, %v678
      %v719 = vpack.c.b16 %v681, %v679
      %v720 = vpack.c.b16 %v684, %v682
      %v721 = vpack.c.b16 %v685, %v683
      %v722 = vpack.c.b16 %v688, %v686
      %v723 = vpack.c.b16 %v689, %v687
      %v724 = vpack.c.b16 %v692, %v690
      %v725 = vpack.c.b16 %v693, %v691
      %758 = vmatprep.subr.bf16.mxu0 %v709
      %759 = vmatpush1.bf16.msra.mxu0 %v708
      %760 = vmatprep.subr.bf16.mxu0 %v707
      %761 = vmatpush1.bf16.msra.mxu0 %v706
      %762 = vmatprep.subr.bf16.mxu0 %v705
      %763 = vmatpush1.bf16.msra.mxu0 %v704
      %764 = vmatprep.subr.bf16.mxu0 %v703
      %765 = vmatpush1.bf16.msra.mxu0 %v702
      %766 = vmatprep.subr.bf16.mxu0 %v701
      %767 = vmatpush1.bf16.msra.mxu0 %v700
      %768 = vmatprep.subr.bf16.mxu0 %v699
      %769 = vmatpush1.bf16.msra.mxu0 %v698
      %770 = vmatprep.subr.bf16.mxu0 %v697
      %771 = vmatpush1.bf16.msra.mxu0 %v696
      %772 = vmatprep.subr.bf16.mxu0 %v695
      %773 = vmatpush1.bf16.msra.mxu0 %v694
      %774 = vmatprep.subr.bf16.mxu0 %v725
      %775 = vmatpush2.bf16.msra.mxu0 %v724
      %776 = vmatprep.subr.bf16.mxu0 %v723
      %777 = vmatpush2.bf16.msra.mxu0 %v722
      %778 = vmatprep.subr.bf16.mxu0 %v721
      %779 = vmatpush2.bf16.msra.mxu0 %v720
      %780 = vmatprep.subr.bf16.mxu0 %v719
      %781 = vmatpush2.bf16.msra.mxu0 %v718
      %782 = vmatprep.subr.bf16.mxu0 %v717
      %783 = vmatpush2.bf16.msra.mxu0 %v716
      %784 = vmatprep.subr.bf16.mxu0 %v715
      %785 = vmatpush2.bf16.msra.mxu0 %v714
      %786 = vmatprep.subr.bf16.mxu0 %v713
      %787 = vmatpush2.bf16.msra.mxu0 %v712
      %788 = vmatprep.subr.bf16.mxu0 %v711
      %789 = vmatpush2.bf16.msra.mxu0 %v710
      %790 = vmatprep.mubr.bf16.mxu0 %v565
      %791 = vmatmul.mubr.bf16.gmra.mxu0 %v564
      %v792 = vpop.f32.mrf.mxu0
      %v793 = vadd.f32 0.0, %v792
      %v794 = vpop.f32.mrf.mxu0
      %v795 = vadd.f32 0.0, %v794
      %v796 = vpop.f32.mrf.mxu0
      %v797 = vadd.f32 0.0, %v796
      %v798 = vpop.f32.mrf.mxu0
      %v799 = vadd.f32 0.0, %v798
      %800 = vdwg.mxu0
      %v801 = vld [vmem:[%s5] sm:$0x3]
      %v803 = vlaneseq
      %v804 = vshrl.u32 %v803, 7
      %v805 = vsub.s32 0, %v804
      %v806 = vrot.slane %v801, %v805
      %v807 = vlaneseq
      %v808 = vshrl.u32 %v807, 7
      %v809 = vsub.s32 1, %v808
      %v810 = vrot.slane %v801, %v809
      %v813 = vmul.f32 %v793, %v806
      %v814 = vmul.f32 %v795, %v810
      %v815 = vmul.f32 %v797, %v806
      %v816 = vmul.f32 %v799, %v810
      %v817 = vld [vmem:[%s6] sm:$0x3]
      %v819 = vlaneseq
      %v820 = vshrl.u32 %v819, 7
      %v821 = vsub.s32 0, %v820
      %v822 = vrot.slane %v817, %v821
      %v823 = vlaneseq
      %v824 = vshrl.u32 %v823, 7
      %v825 = vsub.s32 1, %v824
      %v826 = vrot.slane %v817, %v825
      %v829 = vadd.f32 %v813, %v822
      %v830 = vadd.f32 %v814, %v826
      %v831 = vadd.f32 %v815, %v822
      %v832 = vadd.f32 %v816, %v826
      %v833 = vmax.f32 %v829, 0.0
      %v834 = vmax.f32 %v830, 0.0
      %v835 = vmax.f32 %v831, 0.0
      %v836 = vmax.f32 %v832, 0.0
      %837 = vst [vmem:[%s285] sm:$0xff] %v833
      %838 = vst [vmem:[%s285 + $0x8] sm:$0xff] %v834
      %839 = vst [vmem:[%s285 + $0x10] sm:$0xff] %v835
      %840 = vst [vmem:[%s285 + $0x18] sm:$0xff] %v836
      %s841 = smul.u32 2, %s18
      %p842 = scmp.lt.s32.totalorder %s841, 3
      %s843 = scalar_select %p842, %s841, 3
      %s844 = smul.addr %s843, 2
      %s845 = smul.addr %s844, 8
      %s846 = scalar_lea.vmem %s7, %s845
      // Predicated region
      $region49: #{tpro_forward.1} parent=47 // pred_check
        %p847 = pneg %p188
      $region50: #{tpro_forward.1} parent=47 // pred_check_branch
        %849 = sbr.rel (%p847) target = $region52
      $region51: #{tpro_forward.1} parent=47 // pred_region
        %s850 = smul.u32 2, %s18
      $region52: #{tpro_forward.1} parent=47 // pred_fallthru
        _
    $region48: #{tpro_forward.1} parent=5 // pred_fallthru
      _
    %p851 = scmp.le.s32.totalorder 2, %s13
    // Predicated region
    $region53: #{tpro_forward.1} parent=5 // pred_check
      %p852 = pneg %p851
    $region54: #{tpro_forward.1} parent=5 // pred_check_branch
      %854 = sbr.rel (%p852) target = $region56
    $region55: #{tpro_forward.1} parent=5 // pred_region
      %s855 = ssub.s32 %s13, 2
      // Predicated region
      $region57: #{tpro_forward.1} parent=55 // pred_check
        %p856 = pneg %p194
      $region58: #{tpro_forward.1} parent=55 // pred_check_branch
        %858 = sbr.rel (%p856) target = $region60
      $region59: #{tpro_forward.1} parent=55 // pred_region
        %s859 = smul.u32 2, %s19
        %p860 = scmp.lt.s32.totalorder %s859, 3
        %s861 = scalar_select %p860, %s859, 3
        %s862 = smul.addr %s861, 2
        %s863 = smul.addr %s862, 8
        %s864 = scalar_lea.vmem %s7, %s863
      $region60: #{tpro_forward.1} parent=55 // pred_fallthru
        _
    $region56: #{tpro_forward.1} parent=5 // pred_fallthru
      _
  $region6: #{tpro_forward.1} parent=0 // loop_footer
    %s17 = sadd.s32 1, %s13
  $region7: #{tpro_forward.1} parent=0 // loop_footer_branch
    %12 = sbr.rel target = $region3
  $region8: #{tpro_forward.1} parent=0 // loop_exit
    _

</llo_original>
